<compile_context>
chip_gen: v5e
topology: v5e:2x2
jax: 0.10.0
libtpu: 0.0.40
codegen_flags: <defaults>
</compile_context>

<pallas_src>
import functools

import jax
import jax.numpy as jnp
from jax.experimental import pallas as pl
from jax.experimental.pallas import tpu as pltpu


# --------------------------------------------------------------------------- #
# Kernel
# --------------------------------------------------------------------------- #
def ban_kernel(v_ref, q_ref, wv_ref, bv_ref, wq_ref, bq_ref,
               hmat_ref, hmat_sum_ref, hbias_flat_ref, hbias_sum_ref,
               gsum_ref, gamma_ref, beta_ref,
               logits_ref, att_ref, *, head_block, compute_dtype):
    TB, Nv, Dv = v_ref.shape
    _, Nq, Dq = q_ref.shape
    H, KP = hmat_ref.shape
    cd = compute_dtype

    # --- FCNet: Linear + ReLU.  Inputs/weights already in compute_dtype; MXU
    # accumulates in f32.  M dim is TB*Nv / TB*Nq so the MXU is filled. -------
    v2 = v_ref[...].reshape(TB * Nv, Dv)
    q2 = q_ref[...].reshape(TB * Nq, Dq)
    v_ = jnp.maximum(
        jnp.dot(v2, wv_ref[...], preferred_element_type=jnp.float32)
        + bv_ref[...], 0.0).reshape(TB, Nv, KP)                       # f32
    q_ = jnp.maximum(
        jnp.dot(q2, wq_ref[...], preferred_element_type=jnp.float32)
        + bq_ref[...], 0.0).reshape(TB, Nq, KP)                       # f32
    q_c = q_.astype(cd)

    # --- Attention maps, head-chunked so the [TB, HB, Nv, KP] intermediate is
    # capped (review: never materialize the dense [TB, H, Nv, KP] tensor).
    # Each chunk goes straight to its lane-dense slice of the flat att output.
    hmat = hmat_ref[...]                                              # [H, KP], small
    NvNq = Nv * Nq
    for h0 in range(0, H, head_block):
        hb = min(head_block, H - h0)
        vm = v_[:, None, :, :] * hmat[h0:h0 + hb][None, :, None, :]   # [TB,hb,Nv,KP]
        att = jax.lax.dot_general(
            vm.reshape(TB, hb * Nv, KP).astype(cd), q_c,
            (((2,), (2,)), ((0,), (0,))),
            preferred_element_type=jnp.float32)                       # [TB,hb*Nv,Nq]
        # TODO(synk): if the bundle dump shows XLU (vrot/vxpose) saturating on
        # this sublane->lane flatten, switch to pltpu.einshape or a 3-D out
        # block and benchmark against the masked-store cost.
        att_ref[:, h0 * NvNq:(h0 + hb) * NvNq] = (
            att.reshape(TB, hb * NvNq)
            + hbias_flat_ref[:, h0 * NvNq:(h0 + hb) * NvNq]
        ).astype(att_ref.dtype)

    # --- Fusion path (analytic head-sum; decoupled from the stored att maps).
    # sum_h att[b,h,i,j] = (v_[b]*sum_h hmat) @ q_[b]^T + sum_h h_bias
    vw = (v_ * hmat_sum_ref[...]).astype(cd)                          # [TB,Nv,KP]
    att_sum = jax.lax.dot_general(
        vw, q_c, (((2,), (2,)), ((0,), (0,))),
        preferred_element_type=jnp.float32) + hbias_sum_ref[...]      # [TB,Nv,Nq]
    t = jax.lax.dot_general(
        att_sum.astype(cd), q_c, (((2,), (1,)), ((0,), (0,))),
        preferred_element_type=jnp.float32)                           # [TB,Nv,KP]
    fusion_k = jnp.sum(v_ * t, axis=1)                                # [TB,KP]
    pooled = jnp.dot(fusion_k, gsum_ref[...],
                     preferred_element_type=jnp.float32)              # [TB,h_dim]

    # --- LayerNorm(h_dim), eps = 1e-5 (PyTorch default). ---------------------
    mean = jnp.mean(pooled, axis=-1, keepdims=True)
    var = jnp.mean((pooled - mean) ** 2, axis=-1, keepdims=True)
    norm = (pooled - mean) * jax.lax.rsqrt(var + 1e-5)
    logits_ref[...] = norm * gamma_ref[...] + beta_ref[...]


# --------------------------------------------------------------------------- #
# Wrapper
# --------------------------------------------------------------------------- #
def _tpu_kind():
    try:
        return jax.devices()[0].device_kind.lower()
    except Exception:
        return ""


def _vmem_capacity_bytes(kind):
    try:
        return int(pltpu.get_tpu_info().vmem_capacity_bytes)
    except Exception:
        if "v7" in kind or "7x" in kind:
            return 64 * 1024 * 1024          # v7x: 64 MiB per TensorCore
        return 128 * 1024 * 1024             # v5e / v6e


@functools.partial(
    jax.jit,
    static_argnames=("h_dim", "h_out", "k", "tb_max", "min_grid",
                     "compute_dtype", "att_dtype", "single_buffer_constants"))
def ban_layer(v, q, Wv, bv, Wq, bq, h_mat, h_bias, gamma, beta,
              gv=None, gq=None, *,
              h_dim, h_out, k, tb_max=None, min_grid=None,
              compute_dtype=None, att_dtype=jnp.float32,
              single_buffer_constants=True):
    B, Nv, Dv = v.shape
    _, Nq, Dq = q.shape
    K = h_dim * k
    A = h_out * Nv * Nq

    # Generation-aware defaults (tb_max, compute dtype, grid >= 2 on v7x).
    kind = _tpu_kind()
    newgen = ("v6" in kind) or ("v7" in kind) or ("7x" in kind)
    cd = compute_dtype if compute_dtype is not None else (
        jnp.bfloat16 if newgen else jnp.float32)
    if tb_max is None:
        tb_max = 32 if newgen else 16
    if min_grid is None:
        min_grid = 2 if ("v7" in kind or "7x" in kind) else 1

    # weight_norm(dim=None): effective W = g * W / ||W||_F.  At init g == ||W||
    # so raw W is exact; for trained weights pass gv/gq to fold the scale here.
    if gv is not None:
        Wv = Wv * (gv / jnp.linalg.norm(Wv))
    if gq is not None:
        Wq = Wq * (gq / jnp.linalg.norm(Wq))

    # Zero-pad the K axis to a multiple of 128 (padded lanes are exact zeros:
    # padded Wv/Wq columns and bv/bq entries are 0 -> ReLU(0) = 0 activations,
    # padded h_mat columns / G rows are 0, so every contraction is unchanged).
    KP = ((K + 127) // 128) * 128
    pad = KP - K
    f32 = jnp.float32
    Wv_p = jnp.pad(Wv.astype(f32), ((0, 0), (0, pad)))
    Wq_p = jnp.pad(Wq.astype(f32), ((0, 0), (0, pad)))
    bv_p = jnp.pad(bv.reshape(1, K).astype(f32), ((0, 0), (0, pad)))
    bq_p = jnp.pad(bq.reshape(1, K).astype(f32), ((0, 0), (0, pad)))
    hmat_p = jnp.pad(h_mat.reshape(h_out, K).astype(f32), ((0, 0), (0, pad)))
    # Group-sum matrix folding AvgPool1d(k, k) * k:  G[kk, j] = (kk // k == j).
    kk = jnp.arange(K)
    G = (kk[:, None] // k == jnp.arange(h_dim)[None, :]).astype(f32)
    G_p = jnp.pad(G, ((0, pad), (0, 0)))

    hmat_sum = jnp.sum(hmat_p, axis=0, keepdims=True)                 # [1, KP]
    hb = h_bias.reshape(h_out).astype(f32)
    hbias_flat = jnp.repeat(hb, Nv * Nq).reshape(1, A)                # lane-dense bias
    hbias_sum = jnp.sum(hb).reshape(1, 1)
    gamma2 = gamma.reshape(1, h_dim).astype(f32)
    beta2 = beta.reshape(1, h_dim).astype(f32)

    # Pre-cast MXU operands that dominate DMA/VMEM (review item 1).
    v_in = v.astype(cd)
    q_in = q.astype(cd)
    Wv_in = Wv_p.astype(cd)
    Wq_in = Wq_p.astype(cd)

    in_bytes = jnp.dtype(cd).itemsize
    att_bytes = jnp.dtype(att_dtype).itemsize

    # --- VMEM budgeting: pick TB (batch block) and the head chunk size. ------
    VM_CHUNK_BYTES = 4 * 1024 * 1024      # cap on [TB, HB, Nv, KP] f32 chunk

    def head_block_for(tb):
        per_head = max(tb * Nv * KP * 4, 1)
        return max(1, min(h_out, VM_CHUNK_BYTES // per_head))

    def vmem_bytes(tb):
        hbk = head_block_for(tb)
        moving = 2 * (tb * Nv * Dv * in_bytes + tb * Nq * Dq * in_bytes
                      + tb * h_dim * 4 + tb * A * att_bytes)          # double-buffered
        const_mult = 1 if single_buffer_constants else 2
        const = const_mult * ((Dv + Dq) * KP * in_bytes
                              + (2 * KP + h_out * KP + KP + KP * h_dim
                                 + A + 1 + 2 * h_dim) * 4)
        live = 4 * (2 * tb * Nv * KP + 2 * tb * Nq * KP               # v_, q_, q_c, t
                    + 2 * hbk * tb * Nv * KP                          # vm (+ cast copy)
                    + 2 * tb * hbk * Nv * Nq + 2 * tb * Nv * Nq
                    + tb * KP + tb * h_dim + tb * A)
        return moving + const + live

    cap = _vmem_capacity_bytes(kind)
    budget = int(cap * 0.70)
    candidates = [d for d in range(1, B + 1) if B % d == 0 and d <= max(tb_max, 1)]
    pref = [d for d in candidates if (B // d) >= min_grid] or candidates
    fitting = [d for d in pref if vmem_bytes(d) <= budget] or [min(pref)]
    TB = max(fitting)
    head_block = head_block_for(TB)
    vmem_limit = int(min(cap * 0.75, 100 * 1024 * 1024))

    # --- Specs.  Constant-index operands are single-buffered (no re-DMA ever
    # happens, so double buffers would only waste VMEM). ----------------------
    fixed = lambda b: (0, 0)
    const_mode = pl.Buffered(buffer_count=1) if single_buffer_constants else None

    def const_spec(shape):
        return pl.BlockSpec(shape, fixed, pipeline_mode=const_mode)

    # TODO(synk): on v5e, if the xprof trace shows exposed v/q input DMA, deepen
    # these two specs with pipeline_mode=pl.Buffered(3).
    grid_spec = pltpu.PrefetchScalarGridSpec(
        num_scalar_prefetch=0,
        grid=(B // TB,),
        in_specs=[
            pl.BlockSpec((TB, Nv, Dv), lambda b: (b, 0, 0)),   # v block
            pl.BlockSpec((TB, Nq, Dq), lambda b: (b, 0, 0)),   # q block
            const_spec((Dv, KP)),                              # Wv
            const_spec((1, KP)),                               # bv
            const_spec((Dq, KP)),                              # Wq
            const_spec((1, KP)),                               # bq
            const_spec((h_out, KP)),                           # h_mat
            const_spec((1, KP)),                               # sum_h h_mat
            const_spec((1, A)),                                # h_bias, lane-dense row
            const_spec((1, 1)),                                # sum_h h_bias
            const_spec((KP, h_dim)),                           # G (group-sum)
            const_spec((1, h_dim)),                            # gamma
            const_spec((1, h_dim)),                            # beta
        ],
        out_specs=[
            pl.BlockSpec((TB, h_dim), lambda b: (b, 0)),
            pl.BlockSpec((TB, A), lambda b: (b, 0)),
        ],
    )

    out_shapes = (
        jax.ShapeDtypeStruct((B, h_dim), jnp.float32),         # logits
        jax.ShapeDtypeStruct((B, A), att_dtype),               # att maps, flat
    )

    kernel = functools.partial(ban_kernel, head_block=head_block, compute_dtype=cd)
    logits, att_flat = pl.pallas_call(
        kernel,
        out_shape=out_shapes,
        grid_spec=grid_spec,
        compiler_params=pltpu.CompilerParams(
            dimension_semantics=("parallel",),
            vmem_limit_bytes=vmem_limit),
    )(v_in, q_in, Wv_in, bv_p, Wq_in, bq_p, hmat_p, hmat_sum,
      hbias_flat, hbias_sum, G_p, gamma2, beta2)

    att_maps = att_flat.reshape(B, h_out, Nv, Nq)              # free HBM reshape
    return logits, att_maps


# --------------------------------------------------------------------------- #
# Pure-JAX reference (mirrors the PyTorch forward, eval mode, softmax=False)
# --------------------------------------------------------------------------- #
def ban_reference(v, q, Wv, bv, Wq, bq, h_mat, h_bias, gamma, beta,
                  *, h_dim, h_out, k):
    v_ = jax.nn.relu(v @ Wv + bv)          # [B, Nv, K]
    q_ = jax.nn.relu(q @ Wq + bq)          # [B, Nq, K]
    att = jnp.einsum('hk,bvk,bqk->bhvq', h_mat, v_, q_) + h_bias.reshape(1, h_out, 1, 1)
    logits = jnp.zeros((v.shape[0], h_dim), jnp.float32)
    for i in range(h_out):
        f = jnp.einsum('bvk,bvq,bqk->bk', v_, att[:, i], q_)
        f = f.reshape(v.shape[0], h_dim, k).mean(-1) * k
        logits = logits + f
    mean = logits.mean(-1, keepdims=True)
    var = ((logits - mean) ** 2).mean(-1, keepdims=True)
    logits = (logits - mean) / jnp.sqrt(var + 1e-5) * gamma + beta
    return logits, att


# --------------------------------------------------------------------------- #
# Demo / correctness check
# --------------------------------------------------------------------------- #
if __name__ == "__main__":
    B, Nv, Nq = 2, 8, 8
    v_dim, q_dim, h_dim, h_out, k = 32, 32, 32, 4, 3
    K = h_dim * k

    key = jax.random.PRNGKey(0)
    keys = jax.random.split(key, 10)
    v = jax.random.normal(keys[0], (B, Nv, v_dim), jnp.float32)
    q = jax.random.normal(keys[1], (B, Nq, q_dim), jnp.float32)
    Wv = jax.random.normal(keys[2], (v_dim, K), jnp.float32) * 0.1
    bv = jax.random.normal(keys[3], (K,), jnp.float32) * 0.1
    Wq = jax.random.normal(keys[4], (q_dim, K), jnp.float32) * 0.1
    bq = jax.random.normal(keys[5], (K,), jnp.float32) * 0.1
    h_mat = jax.random.normal(keys[6], (h_out, K), jnp.float32)   # (1,h_out,1,K) squeezed
    h_bias = jax.random.normal(keys[7], (h_out,), jnp.float32)    # (1,h_out,1,1) squeezed
    gamma = jnp.ones((h_dim,), jnp.float32)
    beta = jnp.zeros((h_dim,), jnp.float32)

    args = (v, q, Wv, bv, Wq, bq, h_mat, h_bias, gamma, beta)
    static = dict(h_dim=h_dim, h_out=h_out, k=k)

    single_buf = True

    def run(**kw):
        """Run ban_layer; fall back to double-buffered constants if this JAX
        build rejects pipeline_mode=pl.Buffered(1)."""
        global single_buf
        try:
            out = ban_layer(*args, single_buffer_constants=single_buf, **static, **kw)
            jax.block_until_ready(out)
            return out
        except Exception:
            if not single_buf:
                raise
            single_buf = False
            out = ban_layer(*args, single_buffer_constants=False, **static, **kw)
            jax.block_until_ready(out)
            return out

    ref_logits, ref_att = ban_reference(*args, h_dim=h_dim, h_out=h_out, k=k)

    # 1) f32-operand path: exact-dtype check against the reference.
    logits, att_maps = run(compute_dtype=jnp.float32)
    assert logits.shape == (B, h_dim) and att_maps.shape == (B, h_out, Nv, Nq)
    assert jnp.allclose(logits, ref_logits, rtol=2e-3, atol=2e-3)
    assert jnp.allclose(att_maps, ref_att, rtol=2e-3, atol=2e-3)

    # 2) Default path (bf16 MXU operands on v6e/v7x, f32 accumulation): looser
    #    tolerance — an accuracy-contract decision, not a bug.
    logits_d, att_d = run()
    assert bool(jnp.all(jnp.isfinite(logits_d))) and bool(jnp.all(jnp.isfinite(att_d)))
    assert jnp.allclose(logits_d, ref_logits, rtol=1e-1, atol=1e-1)
    assert jnp.allclose(att_d.astype(jnp.float32), ref_att, rtol=1e-1, atol=1e-1)

    print("KERNEL_OK")
</pallas_src>

<mosaic_0001>
module attributes {stable_mosaic.version = 11 : i64} {
  func.func @ban_kernel(%arg0: i32, %arg1: memref<2x8x32xf32, #tpu.memory_space<vmem>>, %arg2: memref<2x8x32xf32, #tpu.memory_space<vmem>>, %arg3: memref<32x128xf32, #tpu.memory_space<vmem>>, %arg4: memref<1x128xf32, #tpu.memory_space<vmem>>, %arg5: memref<32x128xf32, #tpu.memory_space<vmem>>, %arg6: memref<1x128xf32, #tpu.memory_space<vmem>>, %arg7: memref<4x128xf32, #tpu.memory_space<vmem>>, %arg8: memref<1x128xf32, #tpu.memory_space<vmem>>, %arg9: memref<1x256xf32, #tpu.memory_space<vmem>>, %arg10: memref<1x1xf32, #tpu.memory_space<vmem>>, %arg11: memref<128x32xf32, #tpu.memory_space<vmem>>, %arg12: memref<1x32xf32, #tpu.memory_space<vmem>>, %arg13: memref<1x32xf32, #tpu.memory_space<vmem>>, %arg14: memref<2x32xf32, #tpu.memory_space<vmem>>, %arg15: memref<2x256xf32, #tpu.memory_space<vmem>>) attributes {dimension_semantics = [#tpu.dimension_semantics<parallel>], iteration_bounds = array<i64: 1>, scalar_prefetch = 0 : i64, scratch_operands = 0 : i64, tpu.core_type = #tpu.core_type<tc>, window_params = [{transform_indices = @transform_0, window_bounds = array<i64: 2, 8, 32>}, {transform_indices = @transform_1, window_bounds = array<i64: 2, 8, 32>}, {pipeline_mode = #tpu.pipeline_mode<synchronous>, transform_indices = @transform_2, window_bounds = array<i64: 32, 128>}, {pipeline_mode = #tpu.pipeline_mode<synchronous>, transform_indices = @transform_3, window_bounds = array<i64: 1, 128>}, {pipeline_mode = #tpu.pipeline_mode<synchronous>, transform_indices = @transform_4, window_bounds = array<i64: 32, 128>}, {pipeline_mode = #tpu.pipeline_mode<synchronous>, transform_indices = @transform_5, window_bounds = array<i64: 1, 128>}, {pipeline_mode = #tpu.pipeline_mode<synchronous>, transform_indices = @transform_6, window_bounds = array<i64: 4, 128>}, {pipeline_mode = #tpu.pipeline_mode<synchronous>, transform_indices = @transform_7, window_bounds = array<i64: 1, 128>}, {pipeline_mode = #tpu.pipeline_mode<synchronous>, transform_indices = @transform_8, window_bounds = array<i64: 1, 256>}, {pipeline_mode = #tpu.pipeline_mode<synchronous>, transform_indices = @transform_9, window_bounds = array<i64: 1, 1>}, {pipeline_mode = #tpu.pipeline_mode<synchronous>, transform_indices = @transform_10, window_bounds = array<i64: 128, 32>}, {pipeline_mode = #tpu.pipeline_mode<synchronous>, transform_indices = @transform_11, window_bounds = array<i64: 1, 32>}, {pipeline_mode = #tpu.pipeline_mode<synchronous>, transform_indices = @transform_12, window_bounds = array<i64: 1, 32>}, {transform_indices = @transform_13, window_bounds = array<i64: 2, 32>}, {transform_indices = @transform_14, window_bounds = array<i64: 2, 256>}]} {
    %c0 = arith.constant 0 : index
    %c0_0 = arith.constant 0 : index
    %c0_1 = arith.constant 0 : index
    %0 = vector.load %arg1[%c0, %c0_0, %c0_1] : memref<2x8x32xf32, #tpu.memory_space<vmem>>, vector<2x8x32xf32>
    %1 = vector.shape_cast %0 : vector<2x8x32xf32> to vector<16x32xf32>
    %c0_2 = arith.constant 0 : index
    %c0_3 = arith.constant 0 : index
    %c0_4 = arith.constant 0 : index
    %2 = vector.load %arg2[%c0_2, %c0_3, %c0_4] : memref<2x8x32xf32, #tpu.memory_space<vmem>>, vector<2x8x32xf32>
    %3 = vector.shape_cast %2 : vector<2x8x32xf32> to vector<16x32xf32>
    %c0_5 = arith.constant 0 : index
    %c0_6 = arith.constant 0 : index
    %4 = vector.load %arg3[%c0_5, %c0_6] : memref<32x128xf32, #tpu.memory_space<vmem>>, vector<32x128xf32>
    %cst = arith.constant dense<0.000000e+00> : vector<16x128xf32>
    %5 = tpu.matmul %1, %4, %cst {dimension_numbers = #tpu.dot_dimension_numbers<[1], [0], [0], [1], [0, 0, 1, 1], [], []>} : vector<16x32xf32>, vector<32x128xf32>, vector<16x128xf32> -> vector<16x128xf32>
    %c0_7 = arith.constant 0 : index
    %c0_8 = arith.constant 0 : index
    %6 = vector.load %arg4[%c0_7, %c0_8] : memref<1x128xf32, #tpu.memory_space<vmem>>, vector<1x128xf32>
    %7 = vector.broadcast %6 : vector<1x128xf32> to vector<16x128xf32>
    %8 = arith.addf %5, %7 : vector<16x128xf32>
    %cst_9 = arith.constant 0.000000e+00 : f32
    %9 = vector.broadcast %cst_9 : f32 to vector<16x128xf32>
    %10 = arith.maximumf %8, %9 : vector<16x128xf32>
    %11 = vector.shape_cast %10 : vector<16x128xf32> to vector<2x8x128xf32>
    %c0_10 = arith.constant 0 : index
    %c0_11 = arith.constant 0 : index
    %12 = vector.load %arg5[%c0_10, %c0_11] : memref<32x128xf32, #tpu.memory_space<vmem>>, vector<32x128xf32>
    %cst_12 = arith.constant dense<0.000000e+00> : vector<16x128xf32>
    %13 = tpu.matmul %3, %12, %cst_12 {dimension_numbers = #tpu.dot_dimension_numbers<[1], [0], [0], [1], [0, 0, 1, 1], [], []>} : vector<16x32xf32>, vector<32x128xf32>, vector<16x128xf32> -> vector<16x128xf32>
    %c0_13 = arith.constant 0 : index
    %c0_14 = arith.constant 0 : index
    %14 = vector.load %arg6[%c0_13, %c0_14] : memref<1x128xf32, #tpu.memory_space<vmem>>, vector<1x128xf32>
    %15 = vector.broadcast %14 : vector<1x128xf32> to vector<16x128xf32>
    %16 = arith.addf %13, %15 : vector<16x128xf32>
    %cst_15 = arith.constant 0.000000e+00 : f32
    %17 = vector.broadcast %cst_15 : f32 to vector<16x128xf32>
    %18 = arith.maximumf %16, %17 : vector<16x128xf32>
    %19 = vector.shape_cast %18 : vector<16x128xf32> to vector<2x8x128xf32>
    %c0_16 = arith.constant 0 : index
    %c0_17 = arith.constant 0 : index
    %20 = vector.load %arg7[%c0_16, %c0_17] : memref<4x128xf32, #tpu.memory_space<vmem>>, vector<4x128xf32>
    %21 = vector.shape_cast %11 : vector<2x8x128xf32> to vector<2x1x8x128xf32>
    %22 = vector.shape_cast %20 : vector<4x128xf32> to vector<1x4x1x128xf32>
    %23 = vector.broadcast %21 : vector<2x1x8x128xf32> to vector<2x4x8x128xf32>
    %24 = vector.broadcast %22 : vector<1x4x1x128xf32> to vector<2x4x8x128xf32>
    %25 = arith.mulf %23, %24 : vector<2x4x8x128xf32>
    %26 = vector.shape_cast %25 : vector<2x4x8x128xf32> to vector<2x32x128xf32>
    %cst_18 = arith.constant dense<0.000000e+00> : vector<2x32x8xf32>
    %27 = tpu.matmul %26, %19, %cst_18 {dimension_numbers = #tpu.dot_dimension_numbers<[2], [2], [1], [1], [0, 0, 0, 1, 1, 1], [0], [0]>} : vector<2x32x128xf32>, vector<2x8x128xf32>, vector<2x32x8xf32> -> vector<2x32x8xf32>
    %28 = vector.shape_cast %27 : vector<2x32x8xf32> to vector<2x256xf32>
    %c0_19 = arith.constant 0 : index
    %c0_20 = arith.constant 0 : index
    %29 = vector.load %arg9[%c0_19, %c0_20] : memref<1x256xf32, #tpu.memory_space<vmem>>, vector<1x256xf32>
    %30 = vector.broadcast %29 : vector<1x256xf32> to vector<2x256xf32>
    %31 = arith.addf %28, %30 : vector<2x256xf32>
    %c0_21 = arith.constant 0 : index
    %c0_22 = arith.constant 0 : index
    %32 = vector.load %arg15[%c0_21, %c0_22] : memref<2x256xf32, #tpu.memory_space<vmem>>, vector<2x256xf32>
    tpu.vector_store %arg15[%c0_21, %c0_22], %31 {strides = array<i32>} : memref<2x256xf32, #tpu.memory_space<vmem>>, vector<2x256xf32>,
    %c0_23 = arith.constant 0 : index
    %c0_24 = arith.constant 0 : index
    %33 = vector.load %arg8[%c0_23, %c0_24] : memref<1x128xf32, #tpu.memory_space<vmem>>, vector<1x128xf32>
    %34 = vector.shape_cast %33 : vector<1x128xf32> to vector<1x1x128xf32>
    %35 = vector.broadcast %34 : vector<1x1x128xf32> to vector<2x8x128xf32>
    %36 = arith.mulf %11, %35 : vector<2x8x128xf32>
    %cst_25 = arith.constant dense<0.000000e+00> : vector<2x8x8xf32>
    %37 = tpu.matmul %36, %19, %cst_25 {dimension_numbers = #tpu.dot_dimension_numbers<[2], [2], [1], [1], [0, 0, 0, 1, 1, 1], [0], [0]>} : vector<2x8x128xf32>, vector<2x8x128xf32>, vector<2x8x8xf32> -> vector<2x8x8xf32>
    %c0_26 = arith.constant 0 : index
    %c0_27 = arith.constant 0 : index
    %38 = vector.load %arg10[%c0_26, %c0_27] : memref<1x1xf32, #tpu.memory_space<vmem>>, vector<1x1xf32>
    %39 = vector.shape_cast %38 : vector<1x1xf32> to vector<1x1x1xf32>
    %40 = vector.broadcast %39 : vector<1x1x1xf32> to vector<2x8x8xf32>
    %41 = arith.addf %37, %40 : vector<2x8x8xf32>
    %cst_28 = arith.constant dense<0.000000e+00> : vector<2x8x128xf32>
    %42 = tpu.matmul %41, %19, %cst_28 {dimension_numbers = #tpu.dot_dimension_numbers<[2], [1], [1], [2], [0, 0, 0, 1, 1, 2], [0], [0]>} : vector<2x8x8xf32>, vector<2x8x128xf32>, vector<2x8x128xf32> -> vector<2x8x128xf32>
    %43 = arith.mulf %11, %42 : vector<2x8x128xf32>
    %cst_29 = arith.constant dense<0.000000e+00> : vector<2x128xf32>
    %44 = vector.multi_reduction <add>, %43, %cst_29 [1] : vector<2x8x128xf32> to vector<2x128xf32>
    %c0_30 = arith.constant 0 : index
    %c0_31 = arith.constant 0 : index
    %45 = vector.load %arg11[%c0_30, %c0_31] : memref<128x32xf32, #tpu.memory_space<vmem>>, vector<128x32xf32>
    %cst_32 = arith.constant dense<0.000000e+00> : vector<2x32xf32>
    %46 = tpu.matmul %44, %45, %cst_32 {dimension_numbers = #tpu.dot_dimension_numbers<[1], [0], [0], [1], [0, 0, 1, 1], [], []>} : vector<2x128xf32>, vector<128x32xf32>, vector<2x32xf32> -> vector<2x32xf32>
    %cst_33 = arith.constant dense<0.000000e+00> : vector<2xf32>
    %47 = vector.multi_reduction <add>, %46, %cst_33 [1] : vector<2x32xf32> to vector<2xf32>
    %48 = vector.shape_cast %47 : vector<2xf32> to vector<2x1xf32>
    %cst_34 = arith.constant 3.200000e+01 : f32
    %49 = vector.broadcast %cst_34 : f32 to vector<2x1xf32>
    %50 = arith.divf %48, %49 : vector<2x1xf32>
    %51 = vector.broadcast %50 : vector<2x1xf32> to vector<2x32xf32>
    %52 = arith.subf %46, %51 : vector<2x32xf32>
    %53 = arith.mulf %52, %52 : vector<2x32xf32>
    %cst_35 = arith.constant dense<0.000000e+00> : vector<2xf32>
    %54 = vector.multi_reduction <add>, %53, %cst_35 [1] : vector<2x32xf32> to vector<2xf32>
    %55 = vector.shape_cast %54 : vector<2xf32> to vector<2x1xf32>
    %cst_36 = arith.constant 3.200000e+01 : f32
    %56 = vector.broadcast %cst_36 : f32 to vector<2x1xf32>
    %57 = arith.divf %55, %56 : vector<2x1xf32>
    %58 = vector.broadcast %50 : vector<2x1xf32> to vector<2x32xf32>
    %59 = arith.subf %46, %58 : vector<2x32xf32>
    %cst_37 = arith.constant 9.99999974E-6 : f32
    %60 = vector.broadcast %cst_37 : f32 to vector<2x1xf32>
    %61 = arith.addf %57, %60 : vector<2x1xf32>
    %62 = math.rsqrt %61 : vector<2x1xf32>
    %63 = vector.broadcast %62 : vector<2x1xf32> to vector<2x32xf32>
    %64 = arith.mulf %59, %63 : vector<2x32xf32>
    %c0_38 = arith.constant 0 : index
    %c0_39 = arith.constant 0 : index
    %65 = vector.load %arg12[%c0_38, %c0_39] : memref<1x32xf32, #tpu.memory_space<vmem>>, vector<1x32xf32>
    %66 = vector.broadcast %65 : vector<1x32xf32> to vector<2x32xf32>
    %67 = arith.mulf %64, %66 : vector<2x32xf32>
    %c0_40 = arith.constant 0 : index
    %c0_41 = arith.constant 0 : index
    %68 = vector.load %arg13[%c0_40, %c0_41] : memref<1x32xf32, #tpu.memory_space<vmem>>, vector<1x32xf32>
    %69 = vector.broadcast %68 : vector<1x32xf32> to vector<2x32xf32>
    %70 = arith.addf %67, %69 : vector<2x32xf32>
    %c0_42 = arith.constant 0 : index
    %c0_43 = arith.constant 0 : index
    %71 = vector.load %arg14[%c0_42, %c0_43] : memref<2x32xf32, #tpu.memory_space<vmem>>, vector<2x32xf32>
    tpu.vector_store %arg14[%c0_42, %c0_43], %70 {strides = array<i32>} : memref<2x32xf32, #tpu.memory_space<vmem>>, vector<2x32xf32>,
    return
  }
  func.func @transform_0(%arg0: i32) -> (i32, i32, i32) {
    %c0_i32 = arith.constant 0 : i32
    %c0_i32_0 = arith.constant 0 : i32
    %c0_i32_1 = arith.constant 0 : i32
    return %arg0, %c0_i32, %c0_i32_0 : i32, i32, i32
  }
  func.func @transform_1(%arg0: i32) -> (i32, i32, i32) {
    %c0_i32 = arith.constant 0 : i32
    %c0_i32_0 = arith.constant 0 : i32
    %c0_i32_1 = arith.constant 0 : i32
    return %arg0, %c0_i32, %c0_i32_0 : i32, i32, i32
  }
  func.func @transform_2(%arg0: i32) -> (i32, i32) {
    %c0_i32 = arith.constant 0 : i32
    %c0_i32_0 = arith.constant 0 : i32
    %c0_i32_1 = arith.constant 0 : i32
    return %c0_i32, %c0_i32_0 : i32, i32
  }
  func.func @transform_3(%arg0: i32) -> (i32, i32) {
    %c0_i32 = arith.constant 0 : i32
    %c0_i32_0 = arith.constant 0 : i32
    %c0_i32_1 = arith.constant 0 : i32
    return %c0_i32, %c0_i32_0 : i32, i32
  }
  func.func @transform_4(%arg0: i32) -> (i32, i32) {
    %c0_i32 = arith.constant 0 : i32
    %c0_i32_0 = arith.constant 0 : i32
    %c0_i32_1 = arith.constant 0 : i32
    return %c0_i32, %c0_i32_0 : i32, i32
  }
  func.func @transform_5(%arg0: i32) -> (i32, i32) {
    %c0_i32 = arith.constant 0 : i32
    %c0_i32_0 = arith.constant 0 : i32
    %c0_i32_1 = arith.constant 0 : i32
    return %c0_i32, %c0_i32_0 : i32, i32
  }
  func.func @transform_6(%arg0: i32) -> (i32, i32) {
    %c0_i32 = arith.constant 0 : i32
    %c0_i32_0 = arith.constant 0 : i32
    %c0_i32_1 = arith.constant 0 : i32
    return %c0_i32, %c0_i32_0 : i32, i32
  }
  func.func @transform_7(%arg0: i32) -> (i32, i32) {
    %c0_i32 = arith.constant 0 : i32
    %c0_i32_0 = arith.constant 0 : i32
    %c0_i32_1 = arith.constant 0 : i32
    return %c0_i32, %c0_i32_0 : i32, i32
  }
  func.func @transform_8(%arg0: i32) -> (i32, i32) {
    %c0_i32 = arith.constant 0 : i32
    %c0_i32_0 = arith.constant 0 : i32
    %c0_i32_1 = arith.constant 0 : i32
    return %c0_i32, %c0_i32_0 : i32, i32
  }
  func.func @transform_9(%arg0: i32) -> (i32, i32) {
    %c0_i32 = arith.constant 0 : i32
    %c0_i32_0 = arith.constant 0 : i32
    %c0_i32_1 = arith.constant 0 : i32
    return %c0_i32, %c0_i32_0 : i32, i32
  }
  func.func @transform_10(%arg0: i32) -> (i32, i32) {
    %c0_i32 = arith.constant 0 : i32
    %c0_i32_0 = arith.constant 0 : i32
    %c0_i32_1 = arith.constant 0 : i32
    return %c0_i32, %c0_i32_0 : i32, i32
  }
  func.func @transform_11(%arg0: i32) -> (i32, i32) {
    %c0_i32 = arith.constant 0 : i32
    %c0_i32_0 = arith.constant 0 : i32
    %c0_i32_1 = arith.constant 0 : i32
    return %c0_i32, %c0_i32_0 : i32, i32
  }
  func.func @transform_12(%arg0: i32) -> (i32, i32) {
    %c0_i32 = arith.constant 0 : i32
    %c0_i32_0 = arith.constant 0 : i32
    %c0_i32_1 = arith.constant 0 : i32
    return %c0_i32, %c0_i32_0 : i32, i32
  }
  func.func @transform_13(%arg0: i32) -> (i32, i32) {
    %c0_i32 = arith.constant 0 : i32
    %c0_i32_0 = arith.constant 0 : i32
    return %arg0, %c0_i32 : i32, i32
  }
  func.func @transform_14(%arg0: i32) -> (i32, i32) {
    %c0_i32 = arith.constant 0 : i32
    %c0_i32_0 = arith.constant 0 : i32
    return %arg0, %c0_i32 : i32, i32
  }
}

module attributes {stable_mosaic.version = 11 : i64} {
  func.func @ban_kernel(%arg0: i32, %arg1: memref<2x8x32xf32, #tpu.memory_space<vmem>>, %arg2: memref<2x8x32xf32, #tpu.memory_space<vmem>>, %arg3: memref<32x128xf32, #tpu.memory_space<vmem>>, %arg4: memref<1x128xf32, #tpu.memory_space<vmem>>, %arg5: memref<32x128xf32, #tpu.memory_space<vmem>>, %arg6: memref<1x128xf32, #tpu.memory_space<vmem>>, %arg7: memref<4x128xf32, #tpu.memory_space<vmem>>, %arg8: memref<1x128xf32, #tpu.memory_space<vmem>>, %arg9: memref<1x256xf32, #tpu.memory_space<vmem>>, %arg10: memref<1x1xf32, #tpu.memory_space<vmem>>, %arg11: memref<128x32xf32, #tpu.memory_space<vmem>>, %arg12: memref<1x32xf32, #tpu.memory_space<vmem>>, %arg13: memref<1x32xf32, #tpu.memory_space<vmem>>, %arg14: memref<2x32xf32, #tpu.memory_space<vmem>>, %arg15: memref<2x256xf32, #tpu.memory_space<vmem>>) attributes {dimension_semantics = [#tpu.dimension_semantics<parallel>], iteration_bounds = array<i64: 1>, scalar_prefetch = 0 : i64, scratch_operands = 0 : i64, tpu.core_type = #tpu.core_type<tc>, window_params = [{transform_indices = @transform_0, window_bounds = array<i64: 2, 8, 32>}, {transform_indices = @transform_1, window_bounds = array<i64: 2, 8, 32>}, {pipeline_mode = #tpu.pipeline_mode<synchronous>, transform_indices = @transform_2, window_bounds = array<i64: 32, 128>}, {pipeline_mode = #tpu.pipeline_mode<synchronous>, transform_indices = @transform_3, window_bounds = array<i64: 1, 128>}, {pipeline_mode = #tpu.pipeline_mode<synchronous>, transform_indices = @transform_4, window_bounds = array<i64: 32, 128>}, {pipeline_mode = #tpu.pipeline_mode<synchronous>, transform_indices = @transform_5, window_bounds = array<i64: 1, 128>}, {pipeline_mode = #tpu.pipeline_mode<synchronous>, transform_indices = @transform_6, window_bounds = array<i64: 4, 128>}, {pipeline_mode = #tpu.pipeline_mode<synchronous>, transform_indices = @transform_7, window_bounds = array<i64: 1, 128>}, {pipeline_mode = #tpu.pipeline_mode<synchronous>, transform_indices = @transform_8, window_bounds = array<i64: 1, 256>}, {pipeline_mode = #tpu.pipeline_mode<synchronous>, transform_indices = @transform_9, window_bounds = array<i64: 1, 1>}, {pipeline_mode = #tpu.pipeline_mode<synchronous>, transform_indices = @transform_10, window_bounds = array<i64: 128, 32>}, {pipeline_mode = #tpu.pipeline_mode<synchronous>, transform_indices = @transform_11, window_bounds = array<i64: 1, 32>}, {pipeline_mode = #tpu.pipeline_mode<synchronous>, transform_indices = @transform_12, window_bounds = array<i64: 1, 32>}, {transform_indices = @transform_13, window_bounds = array<i64: 2, 32>}, {transform_indices = @transform_14, window_bounds = array<i64: 2, 256>}]} {
    %c0 = arith.constant 0 : index
    %c0_0 = arith.constant 0 : index
    %c0_1 = arith.constant 0 : index
    %0 = vector.load %arg1[%c0, %c0_0, %c0_1] : memref<2x8x32xf32, #tpu.memory_space<vmem>>, vector<2x8x32xf32>
    %1 = vector.shape_cast %0 : vector<2x8x32xf32> to vector<16x32xf32>
    %c0_2 = arith.constant 0 : index
    %c0_3 = arith.constant 0 : index
    %c0_4 = arith.constant 0 : index
    %2 = vector.load %arg2[%c0_2, %c0_3, %c0_4] : memref<2x8x32xf32, #tpu.memory_space<vmem>>, vector<2x8x32xf32>
    %3 = vector.shape_cast %2 : vector<2x8x32xf32> to vector<16x32xf32>
    %c0_5 = arith.constant 0 : index
    %c0_6 = arith.constant 0 : index
    %4 = vector.load %arg3[%c0_5, %c0_6] : memref<32x128xf32, #tpu.memory_space<vmem>>, vector<32x128xf32>
    %cst = arith.constant dense<0.000000e+00> : vector<16x128xf32>
    %5 = tpu.matmul %1, %4, %cst {dimension_numbers = #tpu.dot_dimension_numbers<[1], [0], [0], [1], [0, 0, 1, 1], [], []>} : vector<16x32xf32>, vector<32x128xf32>, vector<16x128xf32> -> vector<16x128xf32>
    %c0_7 = arith.constant 0 : index
    %c0_8 = arith.constant 0 : index
    %6 = vector.load %arg4[%c0_7, %c0_8] : memref<1x128xf32, #tpu.memory_space<vmem>>, vector<1x128xf32>
    %7 = vector.broadcast %6 : vector<1x128xf32> to vector<16x128xf32>
    %8 = arith.addf %5, %7 : vector<16x128xf32>
    %cst_9 = arith.constant 0.000000e+00 : f32
    %9 = vector.broadcast %cst_9 : f32 to vector<16x128xf32>
    %10 = arith.maximumf %8, %9 : vector<16x128xf32>
    %11 = vector.shape_cast %10 : vector<16x128xf32> to vector<2x8x128xf32>
    %c0_10 = arith.constant 0 : index
    %c0_11 = arith.constant 0 : index
    %12 = vector.load %arg5[%c0_10, %c0_11] : memref<32x128xf32, #tpu.memory_space<vmem>>, vector<32x128xf32>
    %cst_12 = arith.constant dense<0.000000e+00> : vector<16x128xf32>
    %13 = tpu.matmul %3, %12, %cst_12 {dimension_numbers = #tpu.dot_dimension_numbers<[1], [0], [0], [1], [0, 0, 1, 1], [], []>} : vector<16x32xf32>, vector<32x128xf32>, vector<16x128xf32> -> vector<16x128xf32>
    %c0_13 = arith.constant 0 : index
    %c0_14 = arith.constant 0 : index
    %14 = vector.load %arg6[%c0_13, %c0_14] : memref<1x128xf32, #tpu.memory_space<vmem>>, vector<1x128xf32>
    %15 = vector.broadcast %14 : vector<1x128xf32> to vector<16x128xf32>
    %16 = arith.addf %13, %15 : vector<16x128xf32>
    %cst_15 = arith.constant 0.000000e+00 : f32
    %17 = vector.broadcast %cst_15 : f32 to vector<16x128xf32>
    %18 = arith.maximumf %16, %17 : vector<16x128xf32>
    %19 = vector.shape_cast %18 : vector<16x128xf32> to vector<2x8x128xf32>
    %c0_16 = arith.constant 0 : index
    %c0_17 = arith.constant 0 : index
    %20 = vector.load %arg7[%c0_16, %c0_17] : memref<4x128xf32, #tpu.memory_space<vmem>>, vector<4x128xf32>
    %21 = vector.shape_cast %11 : vector<2x8x128xf32> to vector<2x1x8x128xf32>
    %22 = vector.shape_cast %20 : vector<4x128xf32> to vector<1x4x1x128xf32>
    %23 = vector.broadcast %21 : vector<2x1x8x128xf32> to vector<2x4x8x128xf32>
    %24 = vector.broadcast %22 : vector<1x4x1x128xf32> to vector<2x4x8x128xf32>
    %25 = arith.mulf %23, %24 : vector<2x4x8x128xf32>
    %26 = vector.shape_cast %25 : vector<2x4x8x128xf32> to vector<2x32x128xf32>
    %cst_18 = arith.constant dense<0.000000e+00> : vector<2x32x8xf32>
    %27 = tpu.matmul %26, %19, %cst_18 {dimension_numbers = #tpu.dot_dimension_numbers<[2], [2], [1], [1], [0, 0, 0, 1, 1, 1], [0], [0]>} : vector<2x32x128xf32>, vector<2x8x128xf32>, vector<2x32x8xf32> -> vector<2x32x8xf32>
    %28 = vector.shape_cast %27 : vector<2x32x8xf32> to vector<2x256xf32>
    %c0_19 = arith.constant 0 : index
    %c0_20 = arith.constant 0 : index
    %29 = vector.load %arg9[%c0_19, %c0_20] : memref<1x256xf32, #tpu.memory_space<vmem>>, vector<1x256xf32>
    %30 = vector.broadcast %29 : vector<1x256xf32> to vector<2x256xf32>
    %31 = arith.addf %28, %30 : vector<2x256xf32>
    %c0_21 = arith.constant 0 : index
    %c0_22 = arith.constant 0 : index
    %32 = vector.load %arg15[%c0_21, %c0_22] : memref<2x256xf32, #tpu.memory_space<vmem>>, vector<2x256xf32>
    tpu.vector_store %arg15[%c0_21, %c0_22], %31 {strides = array<i32>} : memref<2x256xf32, #tpu.memory_space<vmem>>, vector<2x256xf32>,
    %c0_23 = arith.constant 0 : index
    %c0_24 = arith.constant 0 : index
    %33 = vector.load %arg8[%c0_23, %c0_24] : memref<1x128xf32, #tpu.memory_space<vmem>>, vector<1x128xf32>
    %34 = vector.shape_cast %33 : vector<1x128xf32> to vector<1x1x128xf32>
    %35 = vector.broadcast %34 : vector<1x1x128xf32> to vector<2x8x128xf32>
    %36 = arith.mulf %11, %35 : vector<2x8x128xf32>
    %cst_25 = arith.constant dense<0.000000e+00> : vector<2x8x8xf32>
    %37 = tpu.matmul %36, %19, %cst_25 {dimension_numbers = #tpu.dot_dimension_numbers<[2], [2], [1], [1], [0, 0, 0, 1, 1, 1], [0], [0]>} : vector<2x8x128xf32>, vector<2x8x128xf32>, vector<2x8x8xf32> -> vector<2x8x8xf32>
    %c0_26 = arith.constant 0 : index
    %c0_27 = arith.constant 0 : index
    %38 = vector.load %arg10[%c0_26, %c0_27] : memref<1x1xf32, #tpu.memory_space<vmem>>, vector<1x1xf32>
    %39 = vector.shape_cast %38 : vector<1x1xf32> to vector<1x1x1xf32>
    %40 = vector.broadcast %39 : vector<1x1x1xf32> to vector<2x8x8xf32>
    %41 = arith.addf %37, %40 : vector<2x8x8xf32>
    %cst_28 = arith.constant dense<0.000000e+00> : vector<2x8x128xf32>
    %42 = tpu.matmul %41, %19, %cst_28 {dimension_numbers = #tpu.dot_dimension_numbers<[2], [1], [1], [2], [0, 0, 0, 1, 1, 2], [0], [0]>} : vector<2x8x8xf32>, vector<2x8x128xf32>, vector<2x8x128xf32> -> vector<2x8x128xf32>
    %43 = arith.mulf %11, %42 : vector<2x8x128xf32>
    %cst_29 = arith.constant dense<0.000000e+00> : vector<2x128xf32>
    %44 = vector.multi_reduction <add>, %43, %cst_29 [1] : vector<2x8x128xf32> to vector<2x128xf32>
    %c0_30 = arith.constant 0 : index
    %c0_31 = arith.constant 0 : index
    %45 = vector.load %arg11[%c0_30, %c0_31] : memref<128x32xf32, #tpu.memory_space<vmem>>, vector<128x32xf32>
    %cst_32 = arith.constant dense<0.000000e+00> : vector<2x32xf32>
    %46 = tpu.matmul %44, %45, %cst_32 {dimension_numbers = #tpu.dot_dimension_numbers<[1], [0], [0], [1], [0, 0, 1, 1], [], []>} : vector<2x128xf32>, vector<128x32xf32>, vector<2x32xf32> -> vector<2x32xf32>
    %cst_33 = arith.constant dense<0.000000e+00> : vector<2xf32>
    %47 = vector.multi_reduction <add>, %46, %cst_33 [1] : vector<2x32xf32> to vector<2xf32>
    %48 = vector.shape_cast %47 : vector<2xf32> to vector<2x1xf32>
    %cst_34 = arith.constant 3.200000e+01 : f32
    %49 = vector.broadcast %cst_34 : f32 to vector<2x1xf32>
    %50 = arith.divf %48, %49 : vector<2x1xf32>
    %51 = vector.broadcast %50 : vector<2x1xf32> to vector<2x32xf32>
    %52 = arith.subf %46, %51 : vector<2x32xf32>
    %53 = arith.mulf %52, %52 : vector<2x32xf32>
    %cst_35 = arith.constant dense<0.000000e+00> : vector<2xf32>
    %54 = vector.multi_reduction <add>, %53, %cst_35 [1] : vector<2x32xf32> to vector<2xf32>
    %55 = vector.shape_cast %54 : vector<2xf32> to vector<2x1xf32>
    %cst_36 = arith.constant 3.200000e+01 : f32
    %56 = vector.broadcast %cst_36 : f32 to vector<2x1xf32>
    %57 = arith.divf %55, %56 : vector<2x1xf32>
    %58 = vector.broadcast %50 : vector<2x1xf32> to vector<2x32xf32>
    %59 = arith.subf %46, %58 : vector<2x32xf32>
    %cst_37 = arith.constant 9.99999974E-6 : f32
    %60 = vector.broadcast %cst_37 : f32 to vector<2x1xf32>
    %61 = arith.addf %57, %60 : vector<2x1xf32>
    %62 = math.rsqrt %61 : vector<2x1xf32>
    %63 = vector.broadcast %62 : vector<2x1xf32> to vector<2x32xf32>
    %64 = arith.mulf %59, %63 : vector<2x32xf32>
    %c0_38 = arith.constant 0 : index
    %c0_39 = arith.constant 0 : index
    %65 = vector.load %arg12[%c0_38, %c0_39] : memref<1x32xf32, #tpu.memory_space<vmem>>, vector<1x32xf32>
    %66 = vector.broadcast %65 : vector<1x32xf32> to vector<2x32xf32>
    %67 = arith.mulf %64, %66 : vector<2x32xf32>
    %c0_40 = arith.constant 0 : index
    %c0_41 = arith.constant 0 : index
    %68 = vector.load %arg13[%c0_40, %c0_41] : memref<1x32xf32, #tpu.memory_space<vmem>>, vector<1x32xf32>
    %69 = vector.broadcast %68 : vector<1x32xf32> to vector<2x32xf32>
    %70 = arith.addf %67, %69 : vector<2x32xf32>
    %c0_42 = arith.constant 0 : index
    %c0_43 = arith.constant 0 : index
    %71 = vector.load %arg14[%c0_42, %c0_43] : memref<2x32xf32, #tpu.memory_space<vmem>>, vector<2x32xf32>
    tpu.vector_store %arg14[%c0_42, %c0_43], %70 {strides = array<i32>} : memref<2x32xf32, #tpu.memory_space<vmem>>, vector<2x32xf32>,
    return
  }
  func.func @transform_0(%arg0: i32) -> (i32, i32, i32) {
    %c0_i32 = arith.constant 0 : i32
    %c0_i32_0 = arith.constant 0 : i32
    %c0_i32_1 = arith.constant 0 : i32
    return %arg0, %c0_i32, %c0_i32_0 : i32, i32, i32
  }
  func.func @transform_1(%arg0: i32) -> (i32, i32, i32) {
    %c0_i32 = arith.constant 0 : i32
    %c0_i32_0 = arith.constant 0 : i32
    %c0_i32_1 = arith.constant 0 : i32
    return %arg0, %c0_i32, %c0_i32_0 : i32, i32, i32
  }
  func.func @transform_2(%arg0: i32) -> (i32, i32) {
    %c0_i32 = arith.constant 0 : i32
    %c0_i32_0 = arith.constant 0 : i32
    %c0_i32_1 = arith.constant 0 : i32
    return %c0_i32, %c0_i32_0 : i32, i32
  }
  func.func @transform_3(%arg0: i32) -> (i32, i32) {
    %c0_i32 = arith.constant 0 : i32
    %c0_i32_0 = arith.constant 0 : i32
    %c0_i32_1 = arith.constant 0 : i32
    return %c0_i32, %c0_i32_0 : i32, i32
  }
  func.func @transform_4(%arg0: i32) -> (i32, i32) {
    %c0_i32 = arith.constant 0 : i32
    %c0_i32_0 = arith.constant 0 : i32
    %c0_i32_1 = arith.constant 0 : i32
    return %c0_i32, %c0_i32_0 : i32, i32
  }
  func.func @transform_5(%arg0: i32) -> (i32, i32) {
    %c0_i32 = arith.constant 0 : i32
    %c0_i32_0 = arith.constant 0 : i32
    %c0_i32_1 = arith.constant 0 : i32
    return %c0_i32, %c0_i32_0 : i32, i32
  }
  func.func @transform_6(%arg0: i32) -> (i32, i32) {
    %c0_i32 = arith.constant 0 : i32
    %c0_i32_0 = arith.constant 0 : i32
    %c0_i32_1 = arith.constant 0 : i32
    return %c0_i32, %c0_i32_0 : i32, i32
  }
  func.func @transform_7(%arg0: i32) -> (i32, i32) {
    %c0_i32 = arith.constant 0 : i32
    %c0_i32_0 = arith.constant 0 : i32
    %c0_i32_1 = arith.constant 0 : i32
    return %c0_i32, %c0_i32_0 : i32, i32
  }
  func.func @transform_8(%arg0: i32) -> (i32, i32) {
    %c0_i32 = arith.constant 0 : i32
    %c0_i32_0 = arith.constant 0 : i32
    %c0_i32_1 = arith.constant 0 : i32
    return %c0_i32, %c0_i32_0 : i32, i32
  }
  func.func @transform_9(%arg0: i32) -> (i32, i32) {
    %c0_i32 = arith.constant 0 : i32
    %c0_i32_0 = arith.constant 0 : i32
    %c0_i32_1 = arith.constant 0 : i32
    return %c0_i32, %c0_i32_0 : i32, i32
  }
  func.func @transform_10(%arg0: i32) -> (i32, i32) {
    %c0_i32 = arith.constant 0 : i32
    %c0_i32_0 = arith.constant 0 : i32
    %c0_i32_1 = arith.constant 0 : i32
    return %c0_i32, %c0_i32_0 : i32, i32
  }
  func.func @transform_11(%arg0: i32) -> (i32, i32) {
    %c0_i32 = arith.constant 0 : i32
    %c0_i32_0 = arith.constant 0 : i32
    %c0_i32_1 = arith.constant 0 : i32
    return %c0_i32, %c0_i32_0 : i32, i32
  }
  func.func @transform_12(%arg0: i32) -> (i32, i32) {
    %c0_i32 = arith.constant 0 : i32
    %c0_i32_0 = arith.constant 0 : i32
    %c0_i32_1 = arith.constant 0 : i32
    return %c0_i32, %c0_i32_0 : i32, i32
  }
  func.func @transform_13(%arg0: i32) -> (i32, i32) {
    %c0_i32 = arith.constant 0 : i32
    %c0_i32_0 = arith.constant 0 : i32
    return %arg0, %c0_i32 : i32, i32
  }
  func.func @transform_14(%arg0: i32) -> (i32, i32) {
    %c0_i32 = arith.constant 0 : i32
    %c0_i32_0 = arith.constant 0 : i32
    return %arg0, %c0_i32 : i32, i32
  }
}

</mosaic_0001>

<llo_original>
// kernel: ban_layer.1
$region0: #{ban_layer.1}
  #allocation0 [shape = 'u32[]', space=smem, size = 0x4, offset = 0x4, fixed_abs, tag = 'smem constant byte address 0x4 - core index']
  #allocation1 [shape = 'u32[72,128]{1,0:T(1,128)}', space=vmem, size = 0x9000, scoped, tag = 'internal scratch']
  #allocation2 [shape = 'f32[1,1]{1,0:T(1,128)S(1)}', space=vmem, size = 0x200, scoped, tag = 'scoped memory for ban_layer.1']
  %s0 = inlined_call_operand.vmem [shape: f32[2,8,32], index: 0, kind: input, shape index: {}]
  %s1 = inlined_call_operand.vmem [shape: f32[2,8,32], index: 1, kind: input, shape index: {}]
  %s2 = inlined_call_operand.vmem [shape: f32[32,128], index: 2, kind: input, shape index: {}]
  %s3 = inlined_call_operand.vmem [shape: f32[1,128], index: 3, kind: input, shape index: {}]
  %s4 = inlined_call_operand.vmem [shape: f32[32,128], index: 4, kind: input, shape index: {}]
  %s5 = inlined_call_operand.vmem [shape: f32[1,128], index: 5, kind: input, shape index: {}]
  %s6 = inlined_call_operand.vmem [shape: f32[4,128], index: 6, kind: input, shape index: {}]
  %s7 = inlined_call_operand.vmem [shape: f32[1,128], index: 7, kind: input, shape index: {}]
  %s8 = inlined_call_operand.vmem [shape: f32[1,256], index: 8, kind: input, shape index: {}]
  %s9 = inlined_call_operand.<no memory space> [shape: f32[1,1], index: 9, kind: input, shape index: {}]
  %s10 = inlined_call_operand.vmem [shape: f32[128,32], index: 10, kind: input, shape index: {}]
  %s11 = inlined_call_operand.vmem [shape: f32[1,32], index: 11, kind: input, shape index: {}]
  %s12 = inlined_call_operand.vmem [shape: f32[1,32], index: 12, kind: input, shape index: {}]
  %s13 = inlined_call_operand.hbm [shape: f32[2,32], index: 13, kind: output, shape index: {0}]
  %s14 = inlined_call_operand.vmem [shape: f32[2,256], index: 14, kind: output, shape index: {1}]
  %15 = xla_tuple %s13, %s14
  %s16 = sld [smem:[#allocation0]]
  $region70: #{ban_layer.1} parent=0
    _
  %s18 = ssub.s32 1, %s16
  %s19 = scalar_select 0, %s18, %s16
  %v20 = vstv %s9
  %21 = vst [vmem:[#allocation2] sm:$0x1] %v20
  $region1: #{ban_layer.1} parent=0
    #allocation3 [shape = 'u8[1024]{0}', space=vmem, size = 0x400, scoped, tag = 'output window, operand 0, single buffered']
    #allocation4 [shape = 's32[1]{0}', space=sflag, size = 0x4, scoped, tag = 'scoped memory for ban_layer.1']
    %22 = vsyncpa [#allocation4], 0
    // Predicated region
    $region2: #{ban_layer.1} parent=1 // pred_check
      _
    $region3: #{ban_layer.1} parent=1 // pred_check_branch
      %24 = sbr.rel (0) target = $region5
    $region4: #{ban_layer.1} parent=1 // pred_region
      _
    $region5: #{ban_layer.1} parent=1 // pred_fallthru
      _
    // Predicated region
    $region6: #{ban_layer.1} parent=1 // pred_check
      _
    $region7: #{ban_layer.1} parent=1 // pred_check_branch
      %26 = sbr.rel (0) target = $region9
    $region8: #{ban_layer.1} parent=1 // pred_region
      _
    $region9: #{ban_layer.1} parent=1 // pred_fallthru
      _
    // Predicated region
    $region10: #{ban_layer.1} parent=1 // pred_check
      _
    $region11: #{ban_layer.1} parent=1 // pred_check_branch
      %28 = sbr.rel (0) target = $region13
    $region12: #{ban_layer.1} parent=1 // pred_region
      _
    $region13: #{ban_layer.1} parent=1 // pred_fallthru
      _
    // Predicated region
    $region14: #{ban_layer.1} parent=1 // pred_check
      _
    $region15: #{ban_layer.1} parent=1 // pred_check_branch
      %30 = sbr.rel (0) target = $region17
    $region16: #{ban_layer.1} parent=1 // pred_region
      _
    $region17: #{ban_layer.1} parent=1 // pred_fallthru
      _
    // Predicated region
    $region18: #{ban_layer.1} parent=1 // pred_check
      _
    $region19: #{ban_layer.1} parent=1 // pred_check_branch
      %32 = sbr.rel (0) target = $region21
    $region20: #{ban_layer.1} parent=1 // pred_region
      _
    $region21: #{ban_layer.1} parent=1 // pred_fallthru
      _
    // Predicated region
    $region22: #{ban_layer.1} parent=1 // pred_check
      _
    $region23: #{ban_layer.1} parent=1 // pred_check_branch
      %34 = sbr.rel (0) target = $region25
    $region24: #{ban_layer.1} parent=1 // pred_region
      _
    $region25: #{ban_layer.1} parent=1 // pred_fallthru
      _
    // Predicated region
    $region26: #{ban_layer.1} parent=1 // pred_check
      _
    $region27: #{ban_layer.1} parent=1 // pred_check_branch
      %36 = sbr.rel (0) target = $region29
    $region28: #{ban_layer.1} parent=1 // pred_region
      _
    $region29: #{ban_layer.1} parent=1 // pred_fallthru
      _
    // Predicated region
    $region30: #{ban_layer.1} parent=1 // pred_check
      _
    $region31: #{ban_layer.1} parent=1 // pred_check_branch
      %38 = sbr.rel (0) target = $region33
    $region32: #{ban_layer.1} parent=1 // pred_region
      _
    $region33: #{ban_layer.1} parent=1 // pred_fallthru
      _
    // Predicated region
    $region34: #{ban_layer.1} parent=1 // pred_check
      _
    $region35: #{ban_layer.1} parent=1 // pred_check_branch
      %40 = sbr.rel (0) target = $region37
    $region36: #{ban_layer.1} parent=1 // pred_region
      _
    $region37: #{ban_layer.1} parent=1 // pred_fallthru
      _
    // Predicated region
    $region38: #{ban_layer.1} parent=1 // pred_check
      _
    $region39: #{ban_layer.1} parent=1 // pred_check_branch
      %42 = sbr.rel (0) target = $region41
    $region40: #{ban_layer.1} parent=1 // pred_region
      _
    $region41: #{ban_layer.1} parent=1 // pred_fallthru
      _
    // Predicated region
    $region42: #{ban_layer.1} parent=1 // pred_check
      _
    $region43: #{ban_layer.1} parent=1 // pred_check_branch
      %44 = sbr.rel (0) target = $region45
    $region44: #{ban_layer.1} parent=1 // pred_region
      _
    $region45: #{ban_layer.1} parent=1 // pred_fallthru
      _
    // Predicated region
    $region46: #{ban_layer.1} parent=1 // pred_check
      _
    $region47: #{ban_layer.1} parent=1 // pred_check_branch
      %46 = sbr.rel (0) target = $region49
    $region48: #{ban_layer.1} parent=1 // pred_region
      _
    $region49: #{ban_layer.1} parent=1 // pred_fallthru
      _
    // Predicated region
    $region50: #{ban_layer.1} parent=1 // pred_check
      _
    $region51: #{ban_layer.1} parent=1 // pred_check_branch
      %48 = sbr.rel (0) target = $region53
    $region52: #{ban_layer.1} parent=1 // pred_region
      _
    $region53: #{ban_layer.1} parent=1 // pred_fallthru
      _
    %v49 = vld [vmem:[%s0] sm:$0xff]
    %v50 = vld [vmem:[%s0 + $0x8] sm:$0xff]
    %v51 = vld [vmem:[%s1] sm:$0xff]
    %v52 = vld [vmem:[%s1 + $0x8] sm:$0xff]
    %v53 = vld [vmem:[%s2] sm:$0xff]
    %v54 = vld [vmem:[%s2 + $0x8] sm:$0xff]
    %v55 = vld [vmem:[%s2 + $0x10] sm:$0xff]
    %v56 = vld [vmem:[%s2 + $0x18] sm:$0xff]
    %v57 = vld [vmem:[%s3] sm:$0x1]
    %v59 = vperm.slane %v57, 0
    %vm61 = vcmask 261120
    %v63 = vsel %vm61, %v49, 0
    %v66 = vsel %vm61, %v50, 0
    %68 = vmatpush.msra.mxu0 0.0
    %69 = vmatpush.msra.mxu0 0.0
    %70 = vmatpush.msra.mxu0 0.0
    %71 = vmatpush.msra.mxu0 0.0
    %72 = vmatpush.msra.mxu0 0.0
    %73 = vmatpush.msra.mxu0 0.0
    %74 = vmatpush.msra.mxu0 0.0
    %75 = vmatpush.msra.mxu0 0.0
    %76 = vmatpush.msra.mxu0 0.0
    %77 = vmatpush.msra.mxu0 0.0
    %78 = vmatpush.msra.mxu0 0.0
    %79 = vmatpush.msra.mxu0 0.0
    %80 = vmatpush.msra.mxu0 %v56
    %81 = vmatpush.msra.mxu0 %v55
    %82 = vmatpush.msra.mxu0 %v54
    %83 = vmatpush.msra.mxu0 %v53
    %84 = vmatmul.f32.gmra.mxu0 %v63
    %v85 = vpop.f32.mrf.mxu0
    %v86 = vadd.f32 %v59, %v85
    %87 = vmatmul.f32.gmra.mxu0 %v66
    %v88 = vpop.f32.mrf.mxu0
    %v89 = vadd.f32 %v59, %v88
    %90 = vdwg.mxu0
    %v91 = vmax.f32 %v86, 0.0
    %v92 = vmax.f32 %v89, 0.0
    %v93 = vld [vmem:[%s4] sm:$0xff]
    %v94 = vld [vmem:[%s4 + $0x8] sm:$0xff]
    %v95 = vld [vmem:[%s4 + $0x10] sm:$0xff]
    %v96 = vld [vmem:[%s4 + $0x18] sm:$0xff]
    %v97 = vld [vmem:[%s5] sm:$0x1]
    %v99 = vperm.slane %v97, 0
    %v102 = vsel %vm61, %v51, 0
    %v105 = vsel %vm61, %v52, 0
    %107 = vmatpush.msra.mxu0 0.0
    %108 = vmatpush.msra.mxu0 0.0
    %109 = vmatpush.msra.mxu0 0.0
    %110 = vmatpush.msra.mxu0 0.0
    %111 = vmatpush.msra.mxu0 0.0
    %112 = vmatpush.msra.mxu0 0.0
    %113 = vmatpush.msra.mxu0 0.0
    %114 = vmatpush.msra.mxu0 0.0
    %115 = vmatpush.msra.mxu0 0.0
    %116 = vmatpush.msra.mxu0 0.0
    %117 = vmatpush.msra.mxu0 0.0
    %118 = vmatpush.msra.mxu0 0.0
    %119 = vmatpush.msra.mxu0 %v96
    %120 = vmatpush.msra.mxu0 %v95
    %121 = vmatpush.msra.mxu0 %v94
    %122 = vmatpush.msra.mxu0 %v93
    %123 = vmatmul.f32.gmra.mxu0 %v102
    %v124 = vpop.f32.mrf.mxu0
    %v125 = vadd.f32 %v99, %v124
    %126 = vmatmul.f32.gmra.mxu0 %v105
    %v127 = vpop.f32.mrf.mxu0
    %v128 = vadd.f32 %v99, %v127
    %129 = vdwg.mxu0
    %v130 = vmax.f32 %v125, 0.0
    %v131 = vmax.f32 %v128, 0.0
    %v132 = vld [vmem:[%s6] sm:$0xf]
    %v134 = vrot.slane %v132, 1
    %v135 = vrot.slane %v132, 2
    %v136 = vrot.slane %v132, 3
    %v137 = vperm.slane %v132, 0
    %v138 = vperm.slane %v134, 0
    %v139 = vperm.slane %v135, 0
    %v140 = vperm.slane %v136, 0
    %v145 = vmul.f32 %v91, %v137
    %v146 = vmul.f32 %v91, %v138
    %v147 = vmul.f32 %v91, %v139
    %v148 = vmul.f32 %v91, %v140
    %v149 = vmul.f32 %v92, %v137
    %v150 = vmul.f32 %v92, %v138
    %v151 = vmul.f32 %v92, %v139
    %v152 = vmul.f32 %v92, %v140
    %153 = vmatpush.xpose.msra.mxu0 0.0
    %154 = vmatpush.xpose.msra.mxu0 0.0
    %155 = vmatpush.xpose.msra.mxu0 0.0
    %156 = vmatpush.xpose.msra.mxu0 0.0
    %157 = vmatpush.xpose.msra.mxu0 0.0
    %158 = vmatpush.xpose.msra.mxu0 0.0
    %159 = vmatpush.xpose.msra.mxu0 0.0
    %160 = vmatpush.xpose.msra.mxu0 0.0
    %161 = vmatpush.xpose.msra.mxu0 0.0
    %162 = vmatpush.xpose.msra.mxu0 0.0
    %163 = vmatpush.xpose.msra.mxu0 0.0
    %164 = vmatpush.xpose.msra.mxu0 0.0
    %165 = vmatpush.xpose.msra.mxu0 0.0
    %166 = vmatpush.xpose.msra.mxu0 0.0
    %167 = vmatpush.xpose.msra.mxu0 0.0
    %168 = vmatpush.xpose.msra.mxu0 %v130
    %169 = vmatmul.f32.gmra.mxu0 %v145
    %v170 = vpop.f32.mrf.mxu0
    %v171 = vadd.f32 0.0, %v170
    %172 = vmatmul.f32.gmra.mxu0 %v146
    %v173 = vpop.f32.mrf.mxu0
    %v174 = vadd.f32 0.0, %v173
    %175 = vmatmul.f32.gmra.mxu0 %v147
    %v176 = vpop.f32.mrf.mxu0
    %v177 = vadd.f32 0.0, %v176
    %178 = vmatmul.f32.gmra.mxu0 %v148
    %v179 = vpop.f32.mrf.mxu0
    %v180 = vadd.f32 0.0, %v179
    %181 = vdwg.mxu0
    %182 = vmatpush.xpose.msra.mxu0 0.0
    %183 = vmatpush.xpose.msra.mxu0 0.0
    %184 = vmatpush.xpose.msra.mxu0 0.0
    %185 = vmatpush.xpose.msra.mxu0 0.0
    %186 = vmatpush.xpose.msra.mxu0 0.0
    %187 = vmatpush.xpose.msra.mxu0 0.0
    %188 = vmatpush.xpose.msra.mxu0 0.0
    %189 = vmatpush.xpose.msra.mxu0 0.0
    %190 = vmatpush.xpose.msra.mxu0 0.0
    %191 = vmatpush.xpose.msra.mxu0 0.0
    %192 = vmatpush.xpose.msra.mxu0 0.0
    %193 = vmatpush.xpose.msra.mxu0 0.0
    %194 = vmatpush.xpose.msra.mxu0 0.0
    %195 = vmatpush.xpose.msra.mxu0 0.0
    %196 = vmatpush.xpose.msra.mxu0 0.0
    %197 = vmatpush.xpose.msra.mxu0 %v131
    %198 = vmatmul.f32.gmra.mxu0 %v149
    %v199 = vpop.f32.mrf.mxu0
    %v200 = vadd.f32 0.0, %v199
    %201 = vmatmul.f32.gmra.mxu0 %v150
    %v202 = vpop.f32.mrf.mxu0
    %v203 = vadd.f32 0.0, %v202
    %204 = vmatmul.f32.gmra.mxu0 %v151
    %v205 = vpop.f32.mrf.mxu0
    %v206 = vadd.f32 0.0, %v205
    %207 = vmatmul.f32.gmra.mxu0 %v152
    %v208 = vpop.f32.mrf.mxu0
    %v209 = vadd.f32 0.0, %v208
    %210 = vdwg.mxu0
    %v211 = vrot.slane %v171, 4
    %vm212 = vcmask 1047556
    %v213 = vsel %vm212, 0.0, %v211
    %v215 = vunpack.c.l.s4 1983009808
    %v216 = vunpack.c.0.s8 %v215
    %v217 = vperm.slane %v171, %v216
    %v219 = vunpack.c.l.s4 1983009808
    %v220 = vunpack.c.0.s8 %v219
    %v221 = vperm.slane %v213, %v220
    %v222 = vrot.slane %v200, 4
    %v223 = vsel %vm212, 0.0, %v222
    %v225 = vunpack.c.l.s4 1983009808
    %v226 = vunpack.c.0.s8 %v225
    %v227 = vperm.slane %v200, %v226
    %v229 = vunpack.c.l.s4 1983009808
    %v230 = vunpack.c.0.s8 %v229
    %v231 = vperm.slane %v223, %v230
    %v232 = vrot.slane %v227, 4
    %v233 = vsel %vm212, %v232, %v217
    %v234 = vrot.slane %v217, 4
    %v235 = vsel %vm212, %v227, %v234
    %v237 = vunpack.c.l.s4 1934713408
    %v238 = vunpack.c.0.s8 %v237
    %v239 = vperm.slane %v233, %v238
    %v241 = vunpack.c.l.s4 1934713408
    %v242 = vunpack.c.0.s8 %v241
    %v243 = vperm.slane %v235, %v242
    %v244 = vrot.slane %v231, 4
    %v245 = vsel %vm212, %v244, %v221
    %v246 = vrot.slane %v221, 4
    %v247 = vsel %vm212, %v231, %v246
    %v249 = vunpack.c.l.s4 1934713408
    %v250 = vunpack.c.0.s8 %v249
    %v251 = vperm.slane %v245, %v250
    %v253 = vunpack.c.l.s4 1934713408
    %v254 = vunpack.c.0.s8 %v253
    %v255 = vperm.slane %v247, %v254
    %v256 = vrot.slane %v239, 4
    %v257 = vsel %vm212, 0.0, %v256
    %v258 = vrot.slane %v243, 4
    %v259 = vsel %vm212, 0.0, %v258
    %v260 = vrot.slane %v251, 4
    %v261 = vsel %vm212, 0.0, %v260
    %v262 = vrot.slane %v255, 4
    %v263 = vsel %vm212, 0.0, %v262
    %v264 = vrot.slane %v174, 4
    %v265 = vsel %vm212, 0.0, %v264
    %v267 = vunpack.c.l.s4 1983009808
    %v268 = vunpack.c.0.s8 %v267
    %v269 = vperm.slane %v174, %v268
    %v271 = vunpack.c.l.s4 1983009808
    %v272 = vunpack.c.0.s8 %v271
    %v273 = vperm.slane %v265, %v272
    %v274 = vrot.slane %v203, 4
    %v275 = vsel %vm212, 0.0, %v274
    %v277 = vunpack.c.l.s4 1983009808
    %v278 = vunpack.c.0.s8 %v277
    %v279 = vperm.slane %v203, %v278
    %v281 = vunpack.c.l.s4 1983009808
    %v282 = vunpack.c.0.s8 %v281
    %v283 = vperm.slane %v275, %v282
    %v284 = vrot.slane %v279, 4
    %v285 = vsel %vm212, %v284, %v269
    %v286 = vrot.slane %v269, 4
    %v287 = vsel %vm212, %v279, %v286
    %v289 = vunpack.c.l.s4 1934713408
    %v290 = vunpack.c.0.s8 %v289
    %v291 = vperm.slane %v285, %v290
    %v293 = vunpack.c.l.s4 1934713408
    %v294 = vunpack.c.0.s8 %v293
    %v295 = vperm.slane %v287, %v294
    %v296 = vrot.slane %v283, 4
    %v297 = vsel %vm212, %v296, %v273
    %v298 = vrot.slane %v273, 4
    %v299 = vsel %vm212, %v283, %v298
    %v301 = vunpack.c.l.s4 1934713408
    %v302 = vunpack.c.0.s8 %v301
    %v303 = vperm.slane %v297, %v302
    %v305 = vunpack.c.l.s4 1934713408
    %v306 = vunpack.c.0.s8 %v305
    %v307 = vperm.slane %v299, %v306
    %v308 = vrot.slane %v291, 4
    %v309 = vsel %vm212, 0.0, %v308
    %v310 = vrot.slane %v295, 4
    %v311 = vsel %vm212, 0.0, %v310
    %v312 = vrot.slane %v303, 4
    %v313 = vsel %vm212, 0.0, %v312
    %v314 = vrot.slane %v307, 4
    %v315 = vsel %vm212, 0.0, %v314
    %v316 = vrot.slane %v177, 4
    %v317 = vsel %vm212, 0.0, %v316
    %v319 = vunpack.c.l.s4 1983009808
    %v320 = vunpack.c.0.s8 %v319
    %v321 = vperm.slane %v177, %v320
    %v323 = vunpack.c.l.s4 1983009808
    %v324 = vunpack.c.0.s8 %v323
    %v325 = vperm.slane %v317, %v324
    %v326 = vrot.slane %v206, 4
    %v327 = vsel %vm212, 0.0, %v326
    %v329 = vunpack.c.l.s4 1983009808
    %v330 = vunpack.c.0.s8 %v329
    %v331 = vperm.slane %v206, %v330
    %v333 = vunpack.c.l.s4 1983009808
    %v334 = vunpack.c.0.s8 %v333
    %v335 = vperm.slane %v327, %v334
    %v336 = vrot.slane %v331, 4
    %v337 = vsel %vm212, %v336, %v321
    %v338 = vrot.slane %v321, 4
    %v339 = vsel %vm212, %v331, %v338
    %v341 = vunpack.c.l.s4 1934713408
    %v342 = vunpack.c.0.s8 %v341
    %v343 = vperm.slane %v337, %v342
    %v345 = vunpack.c.l.s4 1934713408
    %v346 = vunpack.c.0.s8 %v345
    %v347 = vperm.slane %v339, %v346
    %v348 = vrot.slane %v335, 4
    %v349 = vsel %vm212, %v348, %v325
    %v350 = vrot.slane %v325, 4
    %v351 = vsel %vm212, %v335, %v350
    %v353 = vunpack.c.l.s4 1934713408
    %v354 = vunpack.c.0.s8 %v353
    %v355 = vperm.slane %v349, %v354
    %v357 = vunpack.c.l.s4 1934713408
    %v358 = vunpack.c.0.s8 %v357
    %v359 = vperm.slane %v351, %v358
    %v360 = vrot.slane %v343, 4
    %v361 = vsel %vm212, 0.0, %v360
    %v362 = vrot.slane %v347, 4
    %v363 = vsel %vm212, 0.0, %v362
    %v364 = vrot.slane %v355, 4
    %v365 = vsel %vm212, 0.0, %v364
    %v366 = vrot.slane %v359, 4
    %v367 = vsel %vm212, 0.0, %v366
    %v368 = vrot.slane %v180, 4
    %v369 = vsel %vm212, 0.0, %v368
    %v371 = vunpack.c.l.s4 1983009808
    %v372 = vunpack.c.0.s8 %v371
    %v373 = vperm.slane %v180, %v372
    %v375 = vunpack.c.l.s4 1983009808
    %v376 = vunpack.c.0.s8 %v375
    %v377 = vperm.slane %v369, %v376
    %v378 = vrot.slane %v209, 4
    %v379 = vsel %vm212, 0.0, %v378
    %v381 = vunpack.c.l.s4 1983009808
    %v382 = vunpack.c.0.s8 %v381
    %v383 = vperm.slane %v209, %v382
    %v385 = vunpack.c.l.s4 1983009808
    %v386 = vunpack.c.0.s8 %v385
    %v387 = vperm.slane %v379, %v386
    %v388 = vrot.slane %v383, 4
    %v389 = vsel %vm212, %v388, %v373
    %v390 = vrot.slane %v373, 4
    %v391 = vsel %vm212, %v383, %v390
    %v393 = vunpack.c.l.s4 1934713408
    %v394 = vunpack.c.0.s8 %v393
    %v395 = vperm.slane %v389, %v394
    %v397 = vunpack.c.l.s4 1934713408
    %v398 = vunpack.c.0.s8 %v397
    %v399 = vperm.slane %v391, %v398
    %v400 = vrot.slane %v387, 4
    %v401 = vsel %vm212, %v400, %v377
    %v402 = vrot.slane %v377, 4
    %v403 = vsel %vm212, %v387, %v402
    %v405 = vunpack.c.l.s4 1934713408
    %v406 = vunpack.c.0.s8 %v405
    %v407 = vperm.slane %v401, %v406
    %v409 = vunpack.c.l.s4 1934713408
    %v410 = vunpack.c.0.s8 %v409
    %v411 = vperm.slane %v403, %v410
    %v412 = vrot.slane %v395, 4
    %v413 = vsel %vm212, 0.0, %v412
    %v414 = vrot.slane %v399, 4
    %v415 = vsel %vm212, 0.0, %v414
    %v416 = vrot.slane %v407, 4
    %v417 = vsel %vm212, 0.0, %v416
    %v418 = vrot.slane %v411, 4
    %v419 = vsel %vm212, 0.0, %v418
    %421 = vrot.lane.b32.xlu0 %v257, 8
    %v422 = vpop.permute.xlu0 %421
    %425 = vrot.lane.b32.xlu0 %v243, 16
    %v426 = vpop.permute.xlu0 %425
    %429 = vrot.lane.b32.xlu0 %v259, 24
    %v430 = vpop.permute.xlu0 %429
    %433 = vrot.lane.b32.xlu0 %v251, 32
    %v434 = vpop.permute.xlu0 %433
    %437 = vrot.lane.b32.xlu0 %v261, 40
    %v438 = vpop.permute.xlu0 %437
    %441 = vrot.lane.b32.xlu0 %v255, 48
    %v442 = vpop.permute.xlu0 %441
    %445 = vrot.lane.b32.xlu0 %v263, 56
    %v446 = vpop.permute.xlu0 %445
    %449 = vrot.lane.b32.xlu0 %v291, 64
    %v450 = vpop.permute.xlu0 %449
    %453 = vrot.lane.b32.xlu0 %v309, 72
    %v454 = vpop.permute.xlu0 %453
    %457 = vrot.lane.b32.xlu0 %v295, 80
    %v458 = vpop.permute.xlu0 %457
    %461 = vrot.lane.b32.xlu0 %v311, 88
    %v462 = vpop.permute.xlu0 %461
    %465 = vrot.lane.b32.xlu0 %v303, 96
    %v466 = vpop.permute.xlu0 %465
    %469 = vrot.lane.b32.xlu0 %v313, 104
    %v470 = vpop.permute.xlu0 %469
    %473 = vrot.lane.b32.xlu0 %v307, 112
    %v474 = vpop.permute.xlu0 %473
    %477 = vrot.lane.b32.xlu0 %v315, 120
    %v478 = vpop.permute.xlu0 %477
    %481 = vrot.lane.b32.xlu0 %v361, 8
    %v482 = vpop.permute.xlu0 %481
    %485 = vrot.lane.b32.xlu0 %v347, 16
    %v486 = vpop.permute.xlu0 %485
    %489 = vrot.lane.b32.xlu0 %v363, 24
    %v490 = vpop.permute.xlu0 %489
    %493 = vrot.lane.b32.xlu0 %v355, 32
    %v494 = vpop.permute.xlu0 %493
    %497 = vrot.lane.b32.xlu0 %v365, 40
    %v498 = vpop.permute.xlu0 %497
    %501 = vrot.lane.b32.xlu0 %v359, 48
    %v502 = vpop.permute.xlu0 %501
    %505 = vrot.lane.b32.xlu0 %v367, 56
    %v506 = vpop.permute.xlu0 %505
    %509 = vrot.lane.b32.xlu0 %v395, 64
    %v510 = vpop.permute.xlu0 %509
    %513 = vrot.lane.b32.xlu0 %v413, 72
    %v514 = vpop.permute.xlu0 %513
    %517 = vrot.lane.b32.xlu0 %v399, 80
    %v518 = vpop.permute.xlu0 %517
    %521 = vrot.lane.b32.xlu0 %v415, 88
    %v522 = vpop.permute.xlu0 %521
    %525 = vrot.lane.b32.xlu0 %v407, 96
    %v526 = vpop.permute.xlu0 %525
    %529 = vrot.lane.b32.xlu0 %v417, 104
    %v530 = vpop.permute.xlu0 %529
    %533 = vrot.lane.b32.xlu0 %v411, 112
    %v534 = vpop.permute.xlu0 %533
    %537 = vrot.lane.b32.xlu0 %v419, 120
    %v538 = vpop.permute.xlu0 %537
    %vm540 = vcmask 64512
    %v541 = vsel %vm540, %v239, %v422
    %vm542 = vcmask 130048
    %v543 = vsel %vm542, %v541, %v426
    %vm544 = vcmask 195584
    %v545 = vsel %vm544, %v543, %v430
    %v546 = vsel %vm61, %v545, %v434
    %vm547 = vcmask 326656
    %v548 = vsel %vm547, %v546, %v438
    %vm549 = vcmask 392192
    %v550 = vsel %vm549, %v548, %v442
    %vm551 = vcmask 457728
    %v552 = vsel %vm551, %v550, %v446
    %vm553 = vcmask 523264
    %v554 = vsel %vm553, %v552, %v450
    %vm555 = vcmask 588800
    %v556 = vsel %vm555, %v554, %v454
    %vm557 = vcmask 654336
    %v558 = vsel %vm557, %v556, %v458
    %vm559 = vcmask 719872
    %v560 = vsel %vm559, %v558, %v462
    %vm561 = vcmask 785408
    %v562 = vsel %vm561, %v560, %v466
    %vm563 = vcmask 850944
    %v564 = vsel %vm563, %v562, %v470
    %vm565 = vcmask 916480
    %v566 = vsel %vm565, %v564, %v474
    %vm567 = vcmask 982016
    %v568 = vsel %vm567, %v566, %v478
    %v569 = vsel %vm540, %v343, %v482
    %v570 = vsel %vm542, %v569, %v486
    %v571 = vsel %vm544, %v570, %v490
    %v572 = vsel %vm61, %v571, %v494
    %v573 = vsel %vm547, %v572, %v498
    %v574 = vsel %vm549, %v573, %v502
    %v575 = vsel %vm551, %v574, %v506
    %v576 = vsel %vm553, %v575, %v510
    %v577 = vsel %vm555, %v576, %v514
    %v578 = vsel %vm557, %v577, %v518
    %v579 = vsel %vm559, %v578, %v522
    %v580 = vsel %vm561, %v579, %v526
    %v581 = vsel %vm563, %v580, %v530
    %v582 = vsel %vm565, %v581, %v534
    %v583 = vsel %vm567, %v582, %v538
    %v584 = vld [vmem:[%s8] sm:$0x3]
    %v586 = vperm.slane %v584, 0
    %v587 = vperm.slane %v584, 1
    %v590 = vadd.f32 %v568, %v586
    %v591 = vadd.f32 %v583, %v587
    %v594 = vrot.slane %v591, 6
    %vm595 = vcmask 1041408
    %v596 = vsel %vm595, %v590, %v594
    %598 = vst [vmem:[%s14] sm:$0xf] %v596
    %v599 = vld [vmem:[%s7] sm:$0x1]
    %v601 = vperm.slane %v599, 0
    %v603 = vmul.f32 %v91, %v601
    %v604 = vmul.f32 %v92, %v601
    %v605 = vld [vmem:[#allocation2] sm:$0x1]
    %v607 = vperm.slane %v605, 0
    %608 = vset.pattern.permute.xlu0 0
    %609 = vperm.xlu0 %608, %v607
    %v610 = vpop.permute.xlu0 %609
    %612 = vmatpush.xpose.msra.mxu0 0.0
    %613 = vmatpush.xpose.msra.mxu0 0.0
    %614 = vmatpush.xpose.msra.mxu0 0.0
    %615 = vmatpush.xpose.msra.mxu0 0.0
    %616 = vmatpush.xpose.msra.mxu0 0.0
    %617 = vmatpush.xpose.msra.mxu0 0.0
    %618 = vmatpush.xpose.msra.mxu0 0.0
    %619 = vmatpush.xpose.msra.mxu0 0.0
    %620 = vmatpush.xpose.msra.mxu0 0.0
    %621 = vmatpush.xpose.msra.mxu0 0.0
    %622 = vmatpush.xpose.msra.mxu0 0.0
    %623 = vmatpush.xpose.msra.mxu0 0.0
    %624 = vmatpush.xpose.msra.mxu0 0.0
    %625 = vmatpush.xpose.msra.mxu0 0.0
    %626 = vmatpush.xpose.msra.mxu0 0.0
    %627 = vmatpush.xpose.msra.mxu0 %v130
    %628 = vmatmul.f32.gmra.mxu0 %v603
    %v629 = vpop.f32.mrf.mxu0
    %v630 = vadd.f32 %v610, %v629
    %631 = vdwg.mxu0
    %632 = vmatpush.xpose.msra.mxu0 0.0
    %633 = vmatpush.xpose.msra.mxu0 0.0
    %634 = vmatpush.xpose.msra.mxu0 0.0
    %635 = vmatpush.xpose.msra.mxu0 0.0
    %636 = vmatpush.xpose.msra.mxu0 0.0
    %637 = vmatpush.xpose.msra.mxu0 0.0
    %638 = vmatpush.xpose.msra.mxu0 0.0
    %639 = vmatpush.xpose.msra.mxu0 0.0
    %640 = vmatpush.xpose.msra.mxu0 0.0
    %641 = vmatpush.xpose.msra.mxu0 0.0
    %642 = vmatpush.xpose.msra.mxu0 0.0
    %643 = vmatpush.xpose.msra.mxu0 0.0
    %644 = vmatpush.xpose.msra.mxu0 0.0
    %645 = vmatpush.xpose.msra.mxu0 0.0
    %646 = vmatpush.xpose.msra.mxu0 0.0
    %647 = vmatpush.xpose.msra.mxu0 %v131
    %648 = vmatmul.f32.gmra.mxu0 %v604
    %v649 = vpop.f32.mrf.mxu0
    %v650 = vadd.f32 %v610, %v649
    %651 = vdwg.mxu0
    %v653 = vsel %vm540, %v630, 0
    %655 = vmatpush.msra.mxu0 0.0
    %656 = vmatpush.msra.mxu0 0.0
    %657 = vmatpush.msra.mxu0 0.0
    %658 = vmatpush.msra.mxu0 0.0
    %659 = vmatpush.msra.mxu0 0.0
    %660 = vmatpush.msra.mxu0 0.0
    %661 = vmatpush.msra.mxu0 0.0
    %662 = vmatpush.msra.mxu0 0.0
    %663 = vmatpush.msra.mxu0 0.0
    %664 = vmatpush.msra.mxu0 0.0
    %665 = vmatpush.msra.mxu0 0.0
    %666 = vmatpush.msra.mxu0 0.0
    %667 = vmatpush.msra.mxu0 0.0
    %668 = vmatpush.msra.mxu0 0.0
    %669 = vmatpush.msra.mxu0 0.0
    %670 = vmatpush.msra.mxu0 %v130
    %671 = vmatmul.f32.gmra.mxu0 %v653
    %v672 = vpop.f32.mrf.mxu0
    %v673 = vadd.f32 0.0, %v672
    %674 = vdwg.mxu0
    %v676 = vsel %vm540, %v650, 0
    %678 = vmatpush.msra.mxu0 0.0
    %679 = vmatpush.msra.mxu0 0.0
    %680 = vmatpush.msra.mxu0 0.0
    %681 = vmatpush.msra.mxu0 0.0
    %682 = vmatpush.msra.mxu0 0.0
    %683 = vmatpush.msra.mxu0 0.0
    %684 = vmatpush.msra.mxu0 0.0
    %685 = vmatpush.msra.mxu0 0.0
    %686 = vmatpush.msra.mxu0 0.0
    %687 = vmatpush.msra.mxu0 0.0
    %688 = vmatpush.msra.mxu0 0.0
    %689 = vmatpush.msra.mxu0 0.0
    %690 = vmatpush.msra.mxu0 0.0
    %691 = vmatpush.msra.mxu0 0.0
    %692 = vmatpush.msra.mxu0 0.0
    %693 = vmatpush.msra.mxu0 %v131
    %694 = vmatmul.f32.gmra.mxu0 %v676
    %v695 = vpop.f32.mrf.mxu0
    %v696 = vadd.f32 0.0, %v695
    %697 = vdwg.mxu0
    %v698 = vmul.f32 %v91, %v673
    %v699 = vmul.f32 %v92, %v696
    %v700 = vrot.slane %v698, 4
    %v701 = vadd.f32 %v698, %v700
    %v702 = vrot.slane %v701, 2
    %v703 = vadd.f32 %v701, %v702
    %v704 = vrot.slane %v703, 1
    %v705 = vadd.f32 %v703, %v704
    %v706 = vrot.slane %v699, 4
    %v707 = vadd.f32 %v699, %v706
    %v708 = vrot.slane %v707, 2
    %v709 = vadd.f32 %v707, %v708
    %v710 = vrot.slane %v709, 1
    %v711 = vadd.f32 %v709, %v710
    %v712 = vld [vmem:[%s10] sm:$0xff]
    %v713 = vld [vmem:[%s10 + $0x8] sm:$0xff]
    %v714 = vld [vmem:[%s10 + $0x10] sm:$0xff]
    %v715 = vld [vmem:[%s10 + $0x18] sm:$0xff]
    %v716 = vld [vmem:[%s10 + $0x20] sm:$0xff]
    %v717 = vld [vmem:[%s10 + $0x28] sm:$0xff]
    %v718 = vld [vmem:[%s10 + $0x30] sm:$0xff]
    %v719 = vld [vmem:[%s10 + $0x38] sm:$0xff]
    %v720 = vld [vmem:[%s10 + $0x40] sm:$0xff]
    %v721 = vld [vmem:[%s10 + $0x48] sm:$0xff]
    %v722 = vld [vmem:[%s10 + $0x50] sm:$0xff]
    %v723 = vld [vmem:[%s10 + $0x58] sm:$0xff]
    %v724 = vld [vmem:[%s10 + $0x60] sm:$0xff]
    %v725 = vld [vmem:[%s10 + $0x68] sm:$0xff]
    %v726 = vld [vmem:[%s10 + $0x70] sm:$0xff]
    %v727 = vld [vmem:[%s10 + $0x78] sm:$0xff]
    %vm730 = vcmask 1041409
    %v731 = vsel %vm730, %v711, %v705
    %733 = vmatpush.msra.mxu0 %v727
    %734 = vmatpush.msra.mxu0 %v726
    %735 = vmatpush.msra.mxu0 %v725
    %736 = vmatpush.msra.mxu0 %v724
    %737 = vmatpush.msra.mxu0 %v723
    %738 = vmatpush.msra.mxu0 %v722
    %739 = vmatpush.msra.mxu0 %v721
    %740 = vmatpush.msra.mxu0 %v720
    %741 = vmatpush.msra.mxu0 %v719
    %742 = vmatpush.msra.mxu0 %v718
    %743 = vmatpush.msra.mxu0 %v717
    %744 = vmatpush.msra.mxu0 %v716
    %745 = vmatpush.msra.mxu0 %v715
    %746 = vmatpush.msra.mxu0 %v714
    %747 = vmatpush.msra.mxu0 %v713
    %748 = vmatpush.msra.mxu0 %v712
    %749 = vmatmul.f32.gmra.mxu0 %v731
    %v750 = vpop.f32.mrf.mxu0
    %v751 = vadd.f32 0.0, %v750
    %752 = vdwg.mxu0
    %vm753 = vcmask 254976
    %v754 = vsel %vm753, %v751, 0.0
    %755 = vadd.xlane.f32.xlu0 %v754
    %v756 = vpop.xlane.xlu0 %755
    %v757 = vrcp.pop 32.0
    %v758 = vmul.f32 32.0, %v757
    %v759 = vsub.f32 1.0, %v758
    %v760 = vmul.f32 %v757, %v759
    %v761 = vadd.f32 %v757, %v760
    %vm762 = vweird.f32 %v757
    %v763 = vsel %vm762, %v757, %v761
    %v764 = vmul.f32 %v756, %v763
    %v765 = vsub.f32 %v751, %v764
    %v766 = vmul.f32 %v765, %v765
    %v767 = vsel %vm753, %v766, 0.0
    %768 = vadd.xlane.f32.xlu0 %v767
    %v769 = vpop.xlane.xlu0 %768
    %v770 = vmul.f32 %v769, %v763
    %v771 = vadd.f32 %v770, 1e-05
    %v772 = vrsqrt.pop %v771
    %v773 = vmul.f32 %v772, %v771
    %v774 = vmul.f32 %v773, %v772
    %v775 = vmul.f32 0.5, %v774
    %v776 = vsub.f32 1.5, %v775
    %v777 = vmul.f32 %v772, %v776
    %vm778 = vweird.f32 %v771
    %vm779 = vweird.f32 %v772
    %vm780 = vmor %vm778, %vm779
    %v781 = vsel %vm780, %v772, %v777
    %v782 = vmul.f32 %v765, %v781
    %v783 = vld [vmem:[%s11] sm:$0x1]
    %v785 = vperm.slane %v783, 0
    %v787 = vmul.f32 %v782, %v785
    %v788 = vld [vmem:[%s12] sm:$0x1]
    %v790 = vperm.slane %v788, 0
    %v792 = vadd.f32 %v787, %v790
    %793 = vst.msk [vmem:[#allocation3] sm:$0x3] %vm753, %v792
    // Predicated region
    $region54: #{ban_layer.1} parent=1 // pred_check
      _
    $region55: #{ban_layer.1} parent=1 // pred_check_branch
      %795 = sbr.rel (0) target = $region57
    $region56: #{ban_layer.1} parent=1 // pred_region
      %797 = vsyncadd [#allocation4], 0
      %s799 = sshll.u32 [#allocation3], 4
      %s800 = int_to_ptr.vmem [resolvable:$true] %s799
      %s801 = sshll.u32 %s13, 4
      %s802 = int_to_ptr.hbm [resolvable:$true] %s801
      %804 = dma.vmem_to_hbm [thread:$0]  %s800, 32, %s802, [#allocation4]
    $region57: #{ban_layer.1} parent=1 // pred_fallthru
      _
    // Predicated region
    $region58: #{ban_layer.1} parent=1 // pred_check
      _
    $region59: #{ban_layer.1} parent=1 // pred_check_branch
      %806 = sbr.rel (0) target = $region61
    $region60: #{ban_layer.1} parent=1 // pred_region
      _
    $region61: #{ban_layer.1} parent=1 // pred_fallthru
      _
    // Predicated region
    $region62: #{ban_layer.1} parent=1 // pred_check
      _
    $region63: #{ban_layer.1} parent=1 // pred_check_branch
      %808 = sbr.rel (0) target = $region65
    $region64: #{ban_layer.1} parent=1 // pred_region
      %810 = dma.done [#allocation4], 32
    $region65: #{ban_layer.1} parent=1 // pred_fallthru
      _
    // Predicated region
    $region66: #{ban_layer.1} parent=1 // pred_check
      _
    $region67: #{ban_layer.1} parent=1 // pred_check_branch
      %812 = sbr.rel (0) target = $region69
    $region68: #{ban_layer.1} parent=1 // pred_region
      _
    $region69: #{ban_layer.1} parent=1 // pred_fallthru
      _
    %813 = vsyncpa [#allocation4], 1

// kernel: ban_layer.1
$region0: #{ban_layer.1}
  #allocation0 [shape = 'u32[]', space=smem, size = 0x4, offset = 0x4, fixed_abs, tag = 'smem constant byte address 0x4 - core index']
  #allocation1 [shape = 'u32[72,128]{1,0:T(1,128)}', space=vmem, size = 0x9000, scoped, tag = 'internal scratch']
  #allocation2 [shape = 'f32[1,1]{1,0:T(1,128)S(1)}', space=vmem, size = 0x200, scoped, tag = 'scoped memory for ban_layer.1']
  %s0 = inlined_call_operand.vmem [shape: f32[2,8,32], index: 0, kind: input, shape index: {}]
  %s1 = inlined_call_operand.vmem [shape: f32[2,8,32], index: 1, kind: input, shape index: {}]
  %s2 = inlined_call_operand.vmem [shape: f32[32,128], index: 2, kind: input, shape index: {}]
  %s3 = inlined_call_operand.vmem [shape: f32[1,128], index: 3, kind: input, shape index: {}]
  %s4 = inlined_call_operand.vmem [shape: f32[32,128], index: 4, kind: input, shape index: {}]
  %s5 = inlined_call_operand.vmem [shape: f32[1,128], index: 5, kind: input, shape index: {}]
  %s6 = inlined_call_operand.vmem [shape: f32[4,128], index: 6, kind: input, shape index: {}]
  %s7 = inlined_call_operand.vmem [shape: f32[1,128], index: 7, kind: input, shape index: {}]
  %s8 = inlined_call_operand.vmem [shape: f32[1,256], index: 8, kind: input, shape index: {}]
  %s9 = inlined_call_operand.<no memory space> [shape: f32[1,1], index: 9, kind: input, shape index: {}]
  %s10 = inlined_call_operand.vmem [shape: f32[128,32], index: 10, kind: input, shape index: {}]
  %s11 = inlined_call_operand.vmem [shape: f32[1,32], index: 11, kind: input, shape index: {}]
  %s12 = inlined_call_operand.vmem [shape: f32[1,32], index: 12, kind: input, shape index: {}]
  %s13 = inlined_call_operand.hbm [shape: f32[2,32], index: 13, kind: output, shape index: {0}]
  %s14 = inlined_call_operand.vmem [shape: f32[2,256], index: 14, kind: output, shape index: {1}]
  %15 = xla_tuple %s13, %s14
  %s16 = sld [smem:[#allocation0]]
  $region70: #{ban_layer.1} parent=0
    _
  %s18 = ssub.s32 1, %s16
  %s19 = scalar_select 0, %s18, %s16
  %v20 = vstv %s9
  %21 = vst [vmem:[#allocation2] sm:$0x1] %v20
  $region1: #{ban_layer.1} parent=0
    #allocation3 [shape = 'u8[1024]{0}', space=vmem, size = 0x400, scoped, tag = 'output window, operand 0, single buffered']
    #allocation4 [shape = 's32[1]{0}', space=sflag, size = 0x4, scoped, tag = 'scoped memory for ban_layer.1']
    %22 = vsyncpa [#allocation4], 0
    // Predicated region
    $region2: #{ban_layer.1} parent=1 // pred_check
      _
    $region3: #{ban_layer.1} parent=1 // pred_check_branch
      %24 = sbr.rel (0) target = $region5
    $region4: #{ban_layer.1} parent=1 // pred_region
      _
    $region5: #{ban_layer.1} parent=1 // pred_fallthru
      _
    // Predicated region
    $region6: #{ban_layer.1} parent=1 // pred_check
      _
    $region7: #{ban_layer.1} parent=1 // pred_check_branch
      %26 = sbr.rel (0) target = $region9
    $region8: #{ban_layer.1} parent=1 // pred_region
      _
    $region9: #{ban_layer.1} parent=1 // pred_fallthru
      _
    // Predicated region
    $region10: #{ban_layer.1} parent=1 // pred_check
      _
    $region11: #{ban_layer.1} parent=1 // pred_check_branch
      %28 = sbr.rel (0) target = $region13
    $region12: #{ban_layer.1} parent=1 // pred_region
      _
    $region13: #{ban_layer.1} parent=1 // pred_fallthru
      _
    // Predicated region
    $region14: #{ban_layer.1} parent=1 // pred_check
      _
    $region15: #{ban_layer.1} parent=1 // pred_check_branch
      %30 = sbr.rel (0) target = $region17
    $region16: #{ban_layer.1} parent=1 // pred_region
      _
    $region17: #{ban_layer.1} parent=1 // pred_fallthru
      _
    // Predicated region
    $region18: #{ban_layer.1} parent=1 // pred_check
      _
    $region19: #{ban_layer.1} parent=1 // pred_check_branch
      %32 = sbr.rel (0) target = $region21
    $region20: #{ban_layer.1} parent=1 // pred_region
      _
    $region21: #{ban_layer.1} parent=1 // pred_fallthru
      _
    // Predicated region
    $region22: #{ban_layer.1} parent=1 // pred_check
      _
    $region23: #{ban_layer.1} parent=1 // pred_check_branch
      %34 = sbr.rel (0) target = $region25
    $region24: #{ban_layer.1} parent=1 // pred_region
      _
    $region25: #{ban_layer.1} parent=1 // pred_fallthru
      _
    // Predicated region
    $region26: #{ban_layer.1} parent=1 // pred_check
      _
    $region27: #{ban_layer.1} parent=1 // pred_check_branch
      %36 = sbr.rel (0) target = $region29
    $region28: #{ban_layer.1} parent=1 // pred_region
      _
    $region29: #{ban_layer.1} parent=1 // pred_fallthru
      _
    // Predicated region
    $region30: #{ban_layer.1} parent=1 // pred_check
      _
    $region31: #{ban_layer.1} parent=1 // pred_check_branch
      %38 = sbr.rel (0) target = $region33
    $region32: #{ban_layer.1} parent=1 // pred_region
      _
    $region33: #{ban_layer.1} parent=1 // pred_fallthru
      _
    // Predicated region
    $region34: #{ban_layer.1} parent=1 // pred_check
      _
    $region35: #{ban_layer.1} parent=1 // pred_check_branch
      %40 = sbr.rel (0) target = $region37
    $region36: #{ban_layer.1} parent=1 // pred_region
      _
    $region37: #{ban_layer.1} parent=1 // pred_fallthru
      _
    // Predicated region
    $region38: #{ban_layer.1} parent=1 // pred_check
      _
    $region39: #{ban_layer.1} parent=1 // pred_check_branch
      %42 = sbr.rel (0) target = $region41
    $region40: #{ban_layer.1} parent=1 // pred_region
      _
    $region41: #{ban_layer.1} parent=1 // pred_fallthru
      _
    // Predicated region
    $region42: #{ban_layer.1} parent=1 // pred_check
      _
    $region43: #{ban_layer.1} parent=1 // pred_check_branch
      %44 = sbr.rel (0) target = $region45
    $region44: #{ban_layer.1} parent=1 // pred_region
      _
    $region45: #{ban_layer.1} parent=1 // pred_fallthru
      _
    // Predicated region
    $region46: #{ban_layer.1} parent=1 // pred_check
      _
    $region47: #{ban_layer.1} parent=1 // pred_check_branch
      %46 = sbr.rel (0) target = $region49
    $region48: #{ban_layer.1} parent=1 // pred_region
      _
    $region49: #{ban_layer.1} parent=1 // pred_fallthru
      _
    // Predicated region
    $region50: #{ban_layer.1} parent=1 // pred_check
      _
    $region51: #{ban_layer.1} parent=1 // pred_check_branch
      %48 = sbr.rel (0) target = $region53
    $region52: #{ban_layer.1} parent=1 // pred_region
      _
    $region53: #{ban_layer.1} parent=1 // pred_fallthru
      _
    %v49 = vld [vmem:[%s0] sm:$0xff]
    %v50 = vld [vmem:[%s0 + $0x8] sm:$0xff]
    %v51 = vld [vmem:[%s1] sm:$0xff]
    %v52 = vld [vmem:[%s1 + $0x8] sm:$0xff]
    %v53 = vld [vmem:[%s2] sm:$0xff]
    %v54 = vld [vmem:[%s2 + $0x8] sm:$0xff]
    %v55 = vld [vmem:[%s2 + $0x10] sm:$0xff]
    %v56 = vld [vmem:[%s2 + $0x18] sm:$0xff]
    %v57 = vld [vmem:[%s3] sm:$0x1]
    %v59 = vperm.slane %v57, 0
    %vm61 = vcmask 261120
    %v63 = vsel %vm61, %v49, 0
    %v66 = vsel %vm61, %v50, 0
    %68 = vmatpush.msra.mxu0 0.0
    %69 = vmatpush.msra.mxu0 0.0
    %70 = vmatpush.msra.mxu0 0.0
    %71 = vmatpush.msra.mxu0 0.0
    %72 = vmatpush.msra.mxu0 0.0
    %73 = vmatpush.msra.mxu0 0.0
    %74 = vmatpush.msra.mxu0 0.0
    %75 = vmatpush.msra.mxu0 0.0
    %76 = vmatpush.msra.mxu0 0.0
    %77 = vmatpush.msra.mxu0 0.0
    %78 = vmatpush.msra.mxu0 0.0
    %79 = vmatpush.msra.mxu0 0.0
    %80 = vmatpush.msra.mxu0 %v56
    %81 = vmatpush.msra.mxu0 %v55
    %82 = vmatpush.msra.mxu0 %v54
    %83 = vmatpush.msra.mxu0 %v53
    %84 = vmatmul.f32.gmra.mxu0 %v63
    %v85 = vpop.f32.mrf.mxu0
    %v86 = vadd.f32 %v59, %v85
    %87 = vmatmul.f32.gmra.mxu0 %v66
    %v88 = vpop.f32.mrf.mxu0
    %v89 = vadd.f32 %v59, %v88
    %90 = vdwg.mxu0
    %v91 = vmax.f32 %v86, 0.0
    %v92 = vmax.f32 %v89, 0.0
    %v93 = vld [vmem:[%s4] sm:$0xff]
    %v94 = vld [vmem:[%s4 + $0x8] sm:$0xff]
    %v95 = vld [vmem:[%s4 + $0x10] sm:$0xff]
    %v96 = vld [vmem:[%s4 + $0x18] sm:$0xff]
    %v97 = vld [vmem:[%s5] sm:$0x1]
    %v99 = vperm.slane %v97, 0
    %v102 = vsel %vm61, %v51, 0
    %v105 = vsel %vm61, %v52, 0
    %107 = vmatpush.msra.mxu0 0.0
    %108 = vmatpush.msra.mxu0 0.0
    %109 = vmatpush.msra.mxu0 0.0
    %110 = vmatpush.msra.mxu0 0.0
    %111 = vmatpush.msra.mxu0 0.0
    %112 = vmatpush.msra.mxu0 0.0
    %113 = vmatpush.msra.mxu0 0.0
    %114 = vmatpush.msra.mxu0 0.0
    %115 = vmatpush.msra.mxu0 0.0
    %116 = vmatpush.msra.mxu0 0.0
    %117 = vmatpush.msra.mxu0 0.0
    %118 = vmatpush.msra.mxu0 0.0
    %119 = vmatpush.msra.mxu0 %v96
    %120 = vmatpush.msra.mxu0 %v95
    %121 = vmatpush.msra.mxu0 %v94
    %122 = vmatpush.msra.mxu0 %v93
    %123 = vmatmul.f32.gmra.mxu0 %v102
    %v124 = vpop.f32.mrf.mxu0
    %v125 = vadd.f32 %v99, %v124
    %126 = vmatmul.f32.gmra.mxu0 %v105
    %v127 = vpop.f32.mrf.mxu0
    %v128 = vadd.f32 %v99, %v127
    %129 = vdwg.mxu0
    %v130 = vmax.f32 %v125, 0.0
    %v131 = vmax.f32 %v128, 0.0
    %v132 = vld [vmem:[%s6] sm:$0xf]
    %v134 = vrot.slane %v132, 1
    %v135 = vrot.slane %v132, 2
    %v136 = vrot.slane %v132, 3
    %v137 = vperm.slane %v132, 0
    %v138 = vperm.slane %v134, 0
    %v139 = vperm.slane %v135, 0
    %v140 = vperm.slane %v136, 0
    %v145 = vmul.f32 %v91, %v137
    %v146 = vmul.f32 %v91, %v138
    %v147 = vmul.f32 %v91, %v139
    %v148 = vmul.f32 %v91, %v140
    %v149 = vmul.f32 %v92, %v137
    %v150 = vmul.f32 %v92, %v138
    %v151 = vmul.f32 %v92, %v139
    %v152 = vmul.f32 %v92, %v140
    %153 = vmatpush.xpose.msra.mxu0 0.0
    %154 = vmatpush.xpose.msra.mxu0 0.0
    %155 = vmatpush.xpose.msra.mxu0 0.0
    %156 = vmatpush.xpose.msra.mxu0 0.0
    %157 = vmatpush.xpose.msra.mxu0 0.0
    %158 = vmatpush.xpose.msra.mxu0 0.0
    %159 = vmatpush.xpose.msra.mxu0 0.0
    %160 = vmatpush.xpose.msra.mxu0 0.0
    %161 = vmatpush.xpose.msra.mxu0 0.0
    %162 = vmatpush.xpose.msra.mxu0 0.0
    %163 = vmatpush.xpose.msra.mxu0 0.0
    %164 = vmatpush.xpose.msra.mxu0 0.0
    %165 = vmatpush.xpose.msra.mxu0 0.0
    %166 = vmatpush.xpose.msra.mxu0 0.0
    %167 = vmatpush.xpose.msra.mxu0 0.0
    %168 = vmatpush.xpose.msra.mxu0 %v130
    %169 = vmatmul.f32.gmra.mxu0 %v145
    %v170 = vpop.f32.mrf.mxu0
    %v171 = vadd.f32 0.0, %v170
    %172 = vmatmul.f32.gmra.mxu0 %v146
    %v173 = vpop.f32.mrf.mxu0
    %v174 = vadd.f32 0.0, %v173
    %175 = vmatmul.f32.gmra.mxu0 %v147
    %v176 = vpop.f32.mrf.mxu0
    %v177 = vadd.f32 0.0, %v176
    %178 = vmatmul.f32.gmra.mxu0 %v148
    %v179 = vpop.f32.mrf.mxu0
    %v180 = vadd.f32 0.0, %v179
    %181 = vdwg.mxu0
    %182 = vmatpush.xpose.msra.mxu0 0.0
    %183 = vmatpush.xpose.msra.mxu0 0.0
    %184 = vmatpush.xpose.msra.mxu0 0.0
    %185 = vmatpush.xpose.msra.mxu0 0.0
    %186 = vmatpush.xpose.msra.mxu0 0.0
    %187 = vmatpush.xpose.msra.mxu0 0.0
    %188 = vmatpush.xpose.msra.mxu0 0.0
    %189 = vmatpush.xpose.msra.mxu0 0.0
    %190 = vmatpush.xpose.msra.mxu0 0.0
    %191 = vmatpush.xpose.msra.mxu0 0.0
    %192 = vmatpush.xpose.msra.mxu0 0.0
    %193 = vmatpush.xpose.msra.mxu0 0.0
    %194 = vmatpush.xpose.msra.mxu0 0.0
    %195 = vmatpush.xpose.msra.mxu0 0.0
    %196 = vmatpush.xpose.msra.mxu0 0.0
    %197 = vmatpush.xpose.msra.mxu0 %v131
    %198 = vmatmul.f32.gmra.mxu0 %v149
    %v199 = vpop.f32.mrf.mxu0
    %v200 = vadd.f32 0.0, %v199
    %201 = vmatmul.f32.gmra.mxu0 %v150
    %v202 = vpop.f32.mrf.mxu0
    %v203 = vadd.f32 0.0, %v202
    %204 = vmatmul.f32.gmra.mxu0 %v151
    %v205 = vpop.f32.mrf.mxu0
    %v206 = vadd.f32 0.0, %v205
    %207 = vmatmul.f32.gmra.mxu0 %v152
    %v208 = vpop.f32.mrf.mxu0
    %v209 = vadd.f32 0.0, %v208
    %210 = vdwg.mxu0
    %v211 = vrot.slane %v171, 4
    %vm212 = vcmask 1047556
    %v213 = vsel %vm212, 0.0, %v211
    %v215 = vunpack.c.l.s4 1983009808
    %v216 = vunpack.c.0.s8 %v215
    %v217 = vperm.slane %v171, %v216
    %v219 = vunpack.c.l.s4 1983009808
    %v220 = vunpack.c.0.s8 %v219
    %v221 = vperm.slane %v213, %v220
    %v222 = vrot.slane %v200, 4
    %v223 = vsel %vm212, 0.0, %v222
    %v225 = vunpack.c.l.s4 1983009808
    %v226 = vunpack.c.0.s8 %v225
    %v227 = vperm.slane %v200, %v226
    %v229 = vunpack.c.l.s4 1983009808
    %v230 = vunpack.c.0.s8 %v229
    %v231 = vperm.slane %v223, %v230
    %v232 = vrot.slane %v227, 4
    %v233 = vsel %vm212, %v232, %v217
    %v234 = vrot.slane %v217, 4
    %v235 = vsel %vm212, %v227, %v234
    %v237 = vunpack.c.l.s4 1934713408
    %v238 = vunpack.c.0.s8 %v237
    %v239 = vperm.slane %v233, %v238
    %v241 = vunpack.c.l.s4 1934713408
    %v242 = vunpack.c.0.s8 %v241
    %v243 = vperm.slane %v235, %v242
    %v244 = vrot.slane %v231, 4
    %v245 = vsel %vm212, %v244, %v221
    %v246 = vrot.slane %v221, 4
    %v247 = vsel %vm212, %v231, %v246
    %v249 = vunpack.c.l.s4 1934713408
    %v250 = vunpack.c.0.s8 %v249
    %v251 = vperm.slane %v245, %v250
    %v253 = vunpack.c.l.s4 1934713408
    %v254 = vunpack.c.0.s8 %v253
    %v255 = vperm.slane %v247, %v254
    %v256 = vrot.slane %v239, 4
    %v257 = vsel %vm212, 0.0, %v256
    %v258 = vrot.slane %v243, 4
    %v259 = vsel %vm212, 0.0, %v258
    %v260 = vrot.slane %v251, 4
    %v261 = vsel %vm212, 0.0, %v260
    %v262 = vrot.slane %v255, 4
    %v263 = vsel %vm212, 0.0, %v262
    %v264 = vrot.slane %v174, 4
    %v265 = vsel %vm212, 0.0, %v264
    %v267 = vunpack.c.l.s4 1983009808
    %v268 = vunpack.c.0.s8 %v267
    %v269 = vperm.slane %v174, %v268
    %v271 = vunpack.c.l.s4 1983009808
    %v272 = vunpack.c.0.s8 %v271
    %v273 = vperm.slane %v265, %v272
    %v274 = vrot.slane %v203, 4
    %v275 = vsel %vm212, 0.0, %v274
    %v277 = vunpack.c.l.s4 1983009808
    %v278 = vunpack.c.0.s8 %v277
    %v279 = vperm.slane %v203, %v278
    %v281 = vunpack.c.l.s4 1983009808
    %v282 = vunpack.c.0.s8 %v281
    %v283 = vperm.slane %v275, %v282
    %v284 = vrot.slane %v279, 4
    %v285 = vsel %vm212, %v284, %v269
    %v286 = vrot.slane %v269, 4
    %v287 = vsel %vm212, %v279, %v286
    %v289 = vunpack.c.l.s4 1934713408
    %v290 = vunpack.c.0.s8 %v289
    %v291 = vperm.slane %v285, %v290
    %v293 = vunpack.c.l.s4 1934713408
    %v294 = vunpack.c.0.s8 %v293
    %v295 = vperm.slane %v287, %v294
    %v296 = vrot.slane %v283, 4
    %v297 = vsel %vm212, %v296, %v273
    %v298 = vrot.slane %v273, 4
    %v299 = vsel %vm212, %v283, %v298
    %v301 = vunpack.c.l.s4 1934713408
    %v302 = vunpack.c.0.s8 %v301
    %v303 = vperm.slane %v297, %v302
    %v305 = vunpack.c.l.s4 1934713408
    %v306 = vunpack.c.0.s8 %v305
    %v307 = vperm.slane %v299, %v306
    %v308 = vrot.slane %v291, 4
    %v309 = vsel %vm212, 0.0, %v308
    %v310 = vrot.slane %v295, 4
    %v311 = vsel %vm212, 0.0, %v310
    %v312 = vrot.slane %v303, 4
    %v313 = vsel %vm212, 0.0, %v312
    %v314 = vrot.slane %v307, 4
    %v315 = vsel %vm212, 0.0, %v314
    %v316 = vrot.slane %v177, 4
    %v317 = vsel %vm212, 0.0, %v316
    %v319 = vunpack.c.l.s4 1983009808
    %v320 = vunpack.c.0.s8 %v319
    %v321 = vperm.slane %v177, %v320
    %v323 = vunpack.c.l.s4 1983009808
    %v324 = vunpack.c.0.s8 %v323
    %v325 = vperm.slane %v317, %v324
    %v326 = vrot.slane %v206, 4
    %v327 = vsel %vm212, 0.0, %v326
    %v329 = vunpack.c.l.s4 1983009808
    %v330 = vunpack.c.0.s8 %v329
    %v331 = vperm.slane %v206, %v330
    %v333 = vunpack.c.l.s4 1983009808
    %v334 = vunpack.c.0.s8 %v333
    %v335 = vperm.slane %v327, %v334
    %v336 = vrot.slane %v331, 4
    %v337 = vsel %vm212, %v336, %v321
    %v338 = vrot.slane %v321, 4
    %v339 = vsel %vm212, %v331, %v338
    %v341 = vunpack.c.l.s4 1934713408
    %v342 = vunpack.c.0.s8 %v341
    %v343 = vperm.slane %v337, %v342
    %v345 = vunpack.c.l.s4 1934713408
    %v346 = vunpack.c.0.s8 %v345
    %v347 = vperm.slane %v339, %v346
    %v348 = vrot.slane %v335, 4
    %v349 = vsel %vm212, %v348, %v325
    %v350 = vrot.slane %v325, 4
    %v351 = vsel %vm212, %v335, %v350
    %v353 = vunpack.c.l.s4 1934713408
    %v354 = vunpack.c.0.s8 %v353
    %v355 = vperm.slane %v349, %v354
    %v357 = vunpack.c.l.s4 1934713408
    %v358 = vunpack.c.0.s8 %v357
    %v359 = vperm.slane %v351, %v358
    %v360 = vrot.slane %v343, 4
    %v361 = vsel %vm212, 0.0, %v360
    %v362 = vrot.slane %v347, 4
    %v363 = vsel %vm212, 0.0, %v362
    %v364 = vrot.slane %v355, 4
    %v365 = vsel %vm212, 0.0, %v364
    %v366 = vrot.slane %v359, 4
    %v367 = vsel %vm212, 0.0, %v366
    %v368 = vrot.slane %v180, 4
    %v369 = vsel %vm212, 0.0, %v368
    %v371 = vunpack.c.l.s4 1983009808
    %v372 = vunpack.c.0.s8 %v371
    %v373 = vperm.slane %v180, %v372
    %v375 = vunpack.c.l.s4 1983009808
    %v376 = vunpack.c.0.s8 %v375
    %v377 = vperm.slane %v369, %v376
    %v378 = vrot.slane %v209, 4
    %v379 = vsel %vm212, 0.0, %v378
    %v381 = vunpack.c.l.s4 1983009808
    %v382 = vunpack.c.0.s8 %v381
    %v383 = vperm.slane %v209, %v382
    %v385 = vunpack.c.l.s4 1983009808
    %v386 = vunpack.c.0.s8 %v385
    %v387 = vperm.slane %v379, %v386
    %v388 = vrot.slane %v383, 4
    %v389 = vsel %vm212, %v388, %v373
    %v390 = vrot.slane %v373, 4
    %v391 = vsel %vm212, %v383, %v390
    %v393 = vunpack.c.l.s4 1934713408
    %v394 = vunpack.c.0.s8 %v393
    %v395 = vperm.slane %v389, %v394
    %v397 = vunpack.c.l.s4 1934713408
    %v398 = vunpack.c.0.s8 %v397
    %v399 = vperm.slane %v391, %v398
    %v400 = vrot.slane %v387, 4
    %v401 = vsel %vm212, %v400, %v377
    %v402 = vrot.slane %v377, 4
    %v403 = vsel %vm212, %v387, %v402
    %v405 = vunpack.c.l.s4 1934713408
    %v406 = vunpack.c.0.s8 %v405
    %v407 = vperm.slane %v401, %v406
    %v409 = vunpack.c.l.s4 1934713408
    %v410 = vunpack.c.0.s8 %v409
    %v411 = vperm.slane %v403, %v410
    %v412 = vrot.slane %v395, 4
    %v413 = vsel %vm212, 0.0, %v412
    %v414 = vrot.slane %v399, 4
    %v415 = vsel %vm212, 0.0, %v414
    %v416 = vrot.slane %v407, 4
    %v417 = vsel %vm212, 0.0, %v416
    %v418 = vrot.slane %v411, 4
    %v419 = vsel %vm212, 0.0, %v418
    %421 = vrot.lane.b32.xlu0 %v257, 8
    %v422 = vpop.permute.xlu0 %421
    %425 = vrot.lane.b32.xlu0 %v243, 16
    %v426 = vpop.permute.xlu0 %425
    %429 = vrot.lane.b32.xlu0 %v259, 24
    %v430 = vpop.permute.xlu0 %429
    %433 = vrot.lane.b32.xlu0 %v251, 32
    %v434 = vpop.permute.xlu0 %433
    %437 = vrot.lane.b32.xlu0 %v261, 40
    %v438 = vpop.permute.xlu0 %437
    %441 = vrot.lane.b32.xlu0 %v255, 48
    %v442 = vpop.permute.xlu0 %441
    %445 = vrot.lane.b32.xlu0 %v263, 56
    %v446 = vpop.permute.xlu0 %445
    %449 = vrot.lane.b32.xlu0 %v291, 64
    %v450 = vpop.permute.xlu0 %449
    %453 = vrot.lane.b32.xlu0 %v309, 72
    %v454 = vpop.permute.xlu0 %453
    %457 = vrot.lane.b32.xlu0 %v295, 80
    %v458 = vpop.permute.xlu0 %457
    %461 = vrot.lane.b32.xlu0 %v311, 88
    %v462 = vpop.permute.xlu0 %461
    %465 = vrot.lane.b32.xlu0 %v303, 96
    %v466 = vpop.permute.xlu0 %465
    %469 = vrot.lane.b32.xlu0 %v313, 104
    %v470 = vpop.permute.xlu0 %469
    %473 = vrot.lane.b32.xlu0 %v307, 112
    %v474 = vpop.permute.xlu0 %473
    %477 = vrot.lane.b32.xlu0 %v315, 120
    %v478 = vpop.permute.xlu0 %477
    %481 = vrot.lane.b32.xlu0 %v361, 8
    %v482 = vpop.permute.xlu0 %481
    %485 = vrot.lane.b32.xlu0 %v347, 16
    %v486 = vpop.permute.xlu0 %485
    %489 = vrot.lane.b32.xlu0 %v363, 24
    %v490 = vpop.permute.xlu0 %489
    %493 = vrot.lane.b32.xlu0 %v355, 32
    %v494 = vpop.permute.xlu0 %493
    %497 = vrot.lane.b32.xlu0 %v365, 40
    %v498 = vpop.permute.xlu0 %497
    %501 = vrot.lane.b32.xlu0 %v359, 48
    %v502 = vpop.permute.xlu0 %501
    %505 = vrot.lane.b32.xlu0 %v367, 56
    %v506 = vpop.permute.xlu0 %505
    %509 = vrot.lane.b32.xlu0 %v395, 64
    %v510 = vpop.permute.xlu0 %509
    %513 = vrot.lane.b32.xlu0 %v413, 72
    %v514 = vpop.permute.xlu0 %513
    %517 = vrot.lane.b32.xlu0 %v399, 80
    %v518 = vpop.permute.xlu0 %517
    %521 = vrot.lane.b32.xlu0 %v415, 88
    %v522 = vpop.permute.xlu0 %521
    %525 = vrot.lane.b32.xlu0 %v407, 96
    %v526 = vpop.permute.xlu0 %525
    %529 = vrot.lane.b32.xlu0 %v417, 104
    %v530 = vpop.permute.xlu0 %529
    %533 = vrot.lane.b32.xlu0 %v411, 112
    %v534 = vpop.permute.xlu0 %533
    %537 = vrot.lane.b32.xlu0 %v419, 120
    %v538 = vpop.permute.xlu0 %537
    %vm540 = vcmask 64512
    %v541 = vsel %vm540, %v239, %v422
    %vm542 = vcmask 130048
    %v543 = vsel %vm542, %v541, %v426
    %vm544 = vcmask 195584
    %v545 = vsel %vm544, %v543, %v430
    %v546 = vsel %vm61, %v545, %v434
    %vm547 = vcmask 326656
    %v548 = vsel %vm547, %v546, %v438
    %vm549 = vcmask 392192
    %v550 = vsel %vm549, %v548, %v442
    %vm551 = vcmask 457728
    %v552 = vsel %vm551, %v550, %v446
    %vm553 = vcmask 523264
    %v554 = vsel %vm553, %v552, %v450
    %vm555 = vcmask 588800
    %v556 = vsel %vm555, %v554, %v454
    %vm557 = vcmask 654336
    %v558 = vsel %vm557, %v556, %v458
    %vm559 = vcmask 719872
    %v560 = vsel %vm559, %v558, %v462
    %vm561 = vcmask 785408
    %v562 = vsel %vm561, %v560, %v466
    %vm563 = vcmask 850944
    %v564 = vsel %vm563, %v562, %v470
    %vm565 = vcmask 916480
    %v566 = vsel %vm565, %v564, %v474
    %vm567 = vcmask 982016
    %v568 = vsel %vm567, %v566, %v478
    %v569 = vsel %vm540, %v343, %v482
    %v570 = vsel %vm542, %v569, %v486
    %v571 = vsel %vm544, %v570, %v490
    %v572 = vsel %vm61, %v571, %v494
    %v573 = vsel %vm547, %v572, %v498
    %v574 = vsel %vm549, %v573, %v502
    %v575 = vsel %vm551, %v574, %v506
    %v576 = vsel %vm553, %v575, %v510
    %v577 = vsel %vm555, %v576, %v514
    %v578 = vsel %vm557, %v577, %v518
    %v579 = vsel %vm559, %v578, %v522
    %v580 = vsel %vm561, %v579, %v526
    %v581 = vsel %vm563, %v580, %v530
    %v582 = vsel %vm565, %v581, %v534
    %v583 = vsel %vm567, %v582, %v538
    %v584 = vld [vmem:[%s8] sm:$0x3]
    %v586 = vperm.slane %v584, 0
    %v587 = vperm.slane %v584, 1
    %v590 = vadd.f32 %v568, %v586
    %v591 = vadd.f32 %v583, %v587
    %v594 = vrot.slane %v591, 6
    %vm595 = vcmask 1041408
    %v596 = vsel %vm595, %v590, %v594
    %598 = vst [vmem:[%s14] sm:$0xf] %v596
    %v599 = vld [vmem:[%s7] sm:$0x1]
    %v601 = vperm.slane %v599, 0
    %v603 = vmul.f32 %v91, %v601
    %v604 = vmul.f32 %v92, %v601
    %v605 = vld [vmem:[#allocation2] sm:$0x1]
    %v607 = vperm.slane %v605, 0
    %608 = vset.pattern.permute.xlu0 0
    %609 = vperm.xlu0 %608, %v607
    %v610 = vpop.permute.xlu0 %609
    %612 = vmatpush.xpose.msra.mxu0 0.0
    %613 = vmatpush.xpose.msra.mxu0 0.0
    %614 = vmatpush.xpose.msra.mxu0 0.0
    %615 = vmatpush.xpose.msra.mxu0 0.0
    %616 = vmatpush.xpose.msra.mxu0 0.0
    %617 = vmatpush.xpose.msra.mxu0 0.0
    %618 = vmatpush.xpose.msra.mxu0 0.0
    %619 = vmatpush.xpose.msra.mxu0 0.0
    %620 = vmatpush.xpose.msra.mxu0 0.0
    %621 = vmatpush.xpose.msra.mxu0 0.0
    %622 = vmatpush.xpose.msra.mxu0 0.0
    %623 = vmatpush.xpose.msra.mxu0 0.0
    %624 = vmatpush.xpose.msra.mxu0 0.0
    %625 = vmatpush.xpose.msra.mxu0 0.0
    %626 = vmatpush.xpose.msra.mxu0 0.0
    %627 = vmatpush.xpose.msra.mxu0 %v130
    %628 = vmatmul.f32.gmra.mxu0 %v603
    %v629 = vpop.f32.mrf.mxu0
    %v630 = vadd.f32 %v610, %v629
    %631 = vdwg.mxu0
    %632 = vmatpush.xpose.msra.mxu0 0.0
    %633 = vmatpush.xpose.msra.mxu0 0.0
    %634 = vmatpush.xpose.msra.mxu0 0.0
    %635 = vmatpush.xpose.msra.mxu0 0.0
    %636 = vmatpush.xpose.msra.mxu0 0.0
    %637 = vmatpush.xpose.msra.mxu0 0.0
    %638 = vmatpush.xpose.msra.mxu0 0.0
    %639 = vmatpush.xpose.msra.mxu0 0.0
    %640 = vmatpush.xpose.msra.mxu0 0.0
    %641 = vmatpush.xpose.msra.mxu0 0.0
    %642 = vmatpush.xpose.msra.mxu0 0.0
    %643 = vmatpush.xpose.msra.mxu0 0.0
    %644 = vmatpush.xpose.msra.mxu0 0.0
    %645 = vmatpush.xpose.msra.mxu0 0.0
    %646 = vmatpush.xpose.msra.mxu0 0.0
    %647 = vmatpush.xpose.msra.mxu0 %v131
    %648 = vmatmul.f32.gmra.mxu0 %v604
    %v649 = vpop.f32.mrf.mxu0
    %v650 = vadd.f32 %v610, %v649
    %651 = vdwg.mxu0
    %v653 = vsel %vm540, %v630, 0
    %655 = vmatpush.msra.mxu0 0.0
    %656 = vmatpush.msra.mxu0 0.0
    %657 = vmatpush.msra.mxu0 0.0
    %658 = vmatpush.msra.mxu0 0.0
    %659 = vmatpush.msra.mxu0 0.0
    %660 = vmatpush.msra.mxu0 0.0
    %661 = vmatpush.msra.mxu0 0.0
    %662 = vmatpush.msra.mxu0 0.0
    %663 = vmatpush.msra.mxu0 0.0
    %664 = vmatpush.msra.mxu0 0.0
    %665 = vmatpush.msra.mxu0 0.0
    %666 = vmatpush.msra.mxu0 0.0
    %667 = vmatpush.msra.mxu0 0.0
    %668 = vmatpush.msra.mxu0 0.0
    %669 = vmatpush.msra.mxu0 0.0
    %670 = vmatpush.msra.mxu0 %v130
    %671 = vmatmul.f32.gmra.mxu0 %v653
    %v672 = vpop.f32.mrf.mxu0
    %v673 = vadd.f32 0.0, %v672
    %674 = vdwg.mxu0
    %v676 = vsel %vm540, %v650, 0
    %678 = vmatpush.msra.mxu0 0.0
    %679 = vmatpush.msra.mxu0 0.0
    %680 = vmatpush.msra.mxu0 0.0
    %681 = vmatpush.msra.mxu0 0.0
    %682 = vmatpush.msra.mxu0 0.0
    %683 = vmatpush.msra.mxu0 0.0
    %684 = vmatpush.msra.mxu0 0.0
    %685 = vmatpush.msra.mxu0 0.0
    %686 = vmatpush.msra.mxu0 0.0
    %687 = vmatpush.msra.mxu0 0.0
    %688 = vmatpush.msra.mxu0 0.0
    %689 = vmatpush.msra.mxu0 0.0
    %690 = vmatpush.msra.mxu0 0.0
    %691 = vmatpush.msra.mxu0 0.0
    %692 = vmatpush.msra.mxu0 0.0
    %693 = vmatpush.msra.mxu0 %v131
    %694 = vmatmul.f32.gmra.mxu0 %v676
    %v695 = vpop.f32.mrf.mxu0
    %v696 = vadd.f32 0.0, %v695
    %697 = vdwg.mxu0
    %v698 = vmul.f32 %v91, %v673
    %v699 = vmul.f32 %v92, %v696
    %v700 = vrot.slane %v698, 4
    %v701 = vadd.f32 %v698, %v700
    %v702 = vrot.slane %v701, 2
    %v703 = vadd.f32 %v701, %v702
    %v704 = vrot.slane %v703, 1
    %v705 = vadd.f32 %v703, %v704
    %v706 = vrot.slane %v699, 4
    %v707 = vadd.f32 %v699, %v706
    %v708 = vrot.slane %v707, 2
    %v709 = vadd.f32 %v707, %v708
    %v710 = vrot.slane %v709, 1
    %v711 = vadd.f32 %v709, %v710
    %v712 = vld [vmem:[%s10] sm:$0xff]
    %v713 = vld [vmem:[%s10 + $0x8] sm:$0xff]
    %v714 = vld [vmem:[%s10 + $0x10] sm:$0xff]
    %v715 = vld [vmem:[%s10 + $0x18] sm:$0xff]
    %v716 = vld [vmem:[%s10 + $0x20] sm:$0xff]
    %v717 = vld [vmem:[%s10 + $0x28] sm:$0xff]
    %v718 = vld [vmem:[%s10 + $0x30] sm:$0xff]
    %v719 = vld [vmem:[%s10 + $0x38] sm:$0xff]
    %v720 = vld [vmem:[%s10 + $0x40] sm:$0xff]
    %v721 = vld [vmem:[%s10 + $0x48] sm:$0xff]
    %v722 = vld [vmem:[%s10 + $0x50] sm:$0xff]
    %v723 = vld [vmem:[%s10 + $0x58] sm:$0xff]
    %v724 = vld [vmem:[%s10 + $0x60] sm:$0xff]
    %v725 = vld [vmem:[%s10 + $0x68] sm:$0xff]
    %v726 = vld [vmem:[%s10 + $0x70] sm:$0xff]
    %v727 = vld [vmem:[%s10 + $0x78] sm:$0xff]
    %vm730 = vcmask 1041409
    %v731 = vsel %vm730, %v711, %v705
    %733 = vmatpush.msra.mxu0 %v727
    %734 = vmatpush.msra.mxu0 %v726
    %735 = vmatpush.msra.mxu0 %v725
    %736 = vmatpush.msra.mxu0 %v724
    %737 = vmatpush.msra.mxu0 %v723
    %738 = vmatpush.msra.mxu0 %v722
    %739 = vmatpush.msra.mxu0 %v721
    %740 = vmatpush.msra.mxu0 %v720
    %741 = vmatpush.msra.mxu0 %v719
    %742 = vmatpush.msra.mxu0 %v718
    %743 = vmatpush.msra.mxu0 %v717
    %744 = vmatpush.msra.mxu0 %v716
    %745 = vmatpush.msra.mxu0 %v715
    %746 = vmatpush.msra.mxu0 %v714
    %747 = vmatpush.msra.mxu0 %v713
    %748 = vmatpush.msra.mxu0 %v712
    %749 = vmatmul.f32.gmra.mxu0 %v731
    %v750 = vpop.f32.mrf.mxu0
    %v751 = vadd.f32 0.0, %v750
    %752 = vdwg.mxu0
    %vm753 = vcmask 254976
    %v754 = vsel %vm753, %v751, 0.0
    %755 = vadd.xlane.f32.xlu0 %v754
    %v756 = vpop.xlane.xlu0 %755
    %v757 = vrcp.pop 32.0
    %v758 = vmul.f32 32.0, %v757
    %v759 = vsub.f32 1.0, %v758
    %v760 = vmul.f32 %v757, %v759
    %v761 = vadd.f32 %v757, %v760
    %vm762 = vweird.f32 %v757
    %v763 = vsel %vm762, %v757, %v761
    %v764 = vmul.f32 %v756, %v763
    %v765 = vsub.f32 %v751, %v764
    %v766 = vmul.f32 %v765, %v765
    %v767 = vsel %vm753, %v766, 0.0
    %768 = vadd.xlane.f32.xlu0 %v767
    %v769 = vpop.xlane.xlu0 %768
    %v770 = vmul.f32 %v769, %v763
    %v771 = vadd.f32 %v770, 1e-05
    %v772 = vrsqrt.pop %v771
    %v773 = vmul.f32 %v772, %v771
    %v774 = vmul.f32 %v773, %v772
    %v775 = vmul.f32 0.5, %v774
    %v776 = vsub.f32 1.5, %v775
    %v777 = vmul.f32 %v772, %v776
    %vm778 = vweird.f32 %v771
    %vm779 = vweird.f32 %v772
    %vm780 = vmor %vm778, %vm779
    %v781 = vsel %vm780, %v772, %v777
    %v782 = vmul.f32 %v765, %v781
    %v783 = vld [vmem:[%s11] sm:$0x1]
    %v785 = vperm.slane %v783, 0
    %v787 = vmul.f32 %v782, %v785
    %v788 = vld [vmem:[%s12] sm:$0x1]
    %v790 = vperm.slane %v788, 0
    %v792 = vadd.f32 %v787, %v790
    %793 = vst.msk [vmem:[#allocation3] sm:$0x3] %vm753, %v792
    // Predicated region
    $region54: #{ban_layer.1} parent=1 // pred_check
      _
    $region55: #{ban_layer.1} parent=1 // pred_check_branch
      %795 = sbr.rel (0) target = $region57
    $region56: #{ban_layer.1} parent=1 // pred_region
      %797 = vsyncadd [#allocation4], 0
      %s799 = sshll.u32 [#allocation3], 4
      %s800 = int_to_ptr.vmem [resolvable:$true] %s799
      %s801 = sshll.u32 %s13, 4
      %s802 = int_to_ptr.hbm [resolvable:$true] %s801
      %804 = dma.vmem_to_hbm [thread:$0]  %s800, 32, %s802, [#allocation4]
    $region57: #{ban_layer.1} parent=1 // pred_fallthru
      _
    // Predicated region
    $region58: #{ban_layer.1} parent=1 // pred_check
      _
    $region59: #{ban_layer.1} parent=1 // pred_check_branch
      %806 = sbr.rel (0) target = $region61
    $region60: #{ban_layer.1} parent=1 // pred_region
      _
    $region61: #{ban_layer.1} parent=1 // pred_fallthru
      _
    // Predicated region
    $region62: #{ban_layer.1} parent=1 // pred_check
      _
    $region63: #{ban_layer.1} parent=1 // pred_check_branch
      %808 = sbr.rel (0) target = $region65
    $region64: #{ban_layer.1} parent=1 // pred_region
      %810 = dma.done [#allocation4], 32
    $region65: #{ban_layer.1} parent=1 // pred_fallthru
      _
    // Predicated region
    $region66: #{ban_layer.1} parent=1 // pred_check
      _
    $region67: #{ban_layer.1} parent=1 // pred_check_branch
      %812 = sbr.rel (0) target = $region69
    $region68: #{ban_layer.1} parent=1 // pred_region
      _
    $region69: #{ban_layer.1} parent=1 // pred_fallthru
      _
    %813 = vsyncpa [#allocation4], 1

</llo_original>
